<compile_context>
chip_gen: v6e
topology: v6e:2x2x1
jax: 0.10.0
libtpu: 0.0.40
codegen_flags: <defaults>
</compile_context>

<pallas_src>
import jax
import jax.numpy as jnp
from jax.experimental import pallas as pl
from jax.experimental.pallas import tpu as pltpu

LANE = 128


def _ceil_to(v, n):
    return -(-v // n) * n


def _gelu(x):
    # TODO(synk): PyTorch nn.GELU defaults to the exact erf form; the tanh
    # approximation (TPU EUP friendly) is used in BOTH kernel and reference.
    return jax.nn.gelu(x, approximate=True)


# ----------------------------- fused Pallas kernel --------------------------

def _feature_fused_kernel(x_ref, w0_ref, b0_ref, w1_ref, b1_ref,
                          w2_ref, b2_ref, w3_ref, b3_ref, o_ref):
    """One batch-block per grid step: 4 x (full-K matmul + bias + GELU) + pool.

    x_ref : (R, K0p) bf16 tokens in planar order — for every 2x2 merge stage
            the four partners of a merged token are the 4 contiguous quarter
            row-slabs of the block (batch index nested INSIDE the merge bits),
            so patch merging == stack row-slabs as lane-dense column slabs.
    o_ref : (Bt, C3p) pooled features for this batch block (lane-dense).
    """

    def stage(x_bf16, w_ref, b_ref):
        z = jnp.dot(x_bf16, w_ref[...], preferred_element_type=jnp.float32)
        return _gelu(z + b_ref[...])            # single post-accum bias add

    def merge(y):
        # 2x2 patch merge: quarter row-slabs -> 128-aligned column slabs so the
        # next stage is ONE fat (rows/4, 4*Cpad) x (4*Cpad, Cpad) MXU matmul.
        rows, c = y.shape
        q = rows // 4
        return jnp.concatenate(
            [y[j * q:(j + 1) * q, :] for j in range(4)], axis=-1
        ).astype(jnp.bfloat16)

    # TODO(synk): at real (224^2) image sizes the stage-0 activation should be
    # staged through a VMEM scratch instead of living purely in values.
    y = stage(x_ref[...], w0_ref, b0_ref)       # stage 0: 4x4 patch embed
    y = stage(merge(y), w1_ref, b1_ref)         # stage 1: 2x2 merge + proj
    y = stage(merge(y), w2_ref, b2_ref)         # stage 2
    y = stage(merge(y), w3_ref, b3_ref)         # stage 3 -> (Bt*hw_f, C3p) f32

    # feature_extract = AdaptiveAvgPool2d(1) + Flatten(1): per-image mean.
    bt, c3p = o_ref.shape
    hw_f = y.shape[0] // bt
    o_ref[...] = jnp.mean(y.reshape(bt, hw_f, c3p), axis=1).astype(o_ref.dtype)


# ------------------------------ JAX wrapper ----------------------------------

def to_planar_tokens(x_nchw, patch=4, batch_block=1):
    """NCHW -> (G*Bt*(H//patch)*(W//patch), patch*patch*C) token matrix.

    Within each grid block of `batch_block` images, rows are ordered
    (h1, w1, h2, w2, h3, w3, b_inner, Hb, Wb) so that for every one of the
    three 2x2 merge stages the 4 partners are the 4 contiguous quarter
    row-slabs of the WHOLE block (batch nested inside the merge bits).
    One-time layout plumbing in XLA; no per-stage activation shuffles.
    """
    B, C, H, W = x_nchw.shape
    blk = patch * 8                                   # /32 total downsample
    assert H % blk == 0 and W % blk == 0 and B % batch_block == 0
    G = B // batch_block
    x = jnp.transpose(x_nchw, (0, 2, 3, 1))           # NHWC
    x = x.reshape(G, batch_block,
                  H // blk, 2, 2, 2, patch,
                  W // blk, 2, 2, 2, patch, C)
    #            (g, bi, Hb, h3, h2, h1, h0, Wb, w3, w2, w1, w0, c)
    #             0   1   2   3   4   5   6   7   8   9  10  11 12
    x = x.transpose(0, 5, 10, 4, 9, 3, 8, 1, 2, 7, 6, 11, 12)
    #          -> (g, h1, w1, h2, w2, h3, w3, bi, Hb, Wb, h0, w0, c)
    return x.reshape(G * batch_block * (H // patch) * (W // patch),
                     patch * patch * C)


def feature_forward(params, x_nchw, batch_block=None):
    """Feature.forward: encoder(x) -> x[-1] -> avgpool(1) -> flatten (fused)."""
    B, _, H, W = x_nchw.shape
    if batch_block is None:
        # Keep the grid an even number of steps (2) so both v7x TensorCores get
        # equal work, while maximizing per-step rows (amortizes step overhead).
        batch_block = B // 2 if (B % 2 == 0 and B >= 2) else B
    G = B // batch_block
    m = (H // 4) * (W // 4)                            # tokens / image, stage 0
    R = batch_block * m                                # rows per grid block

    # One-time planar re-layout + zero-pad K0 to a lane-dense multiple of 128.
    x0 = to_planar_tokens(x_nchw.astype(jnp.float32), patch=4,
                          batch_block=batch_block)
    k0_real = x0.shape[1]
    k0p = _ceil_to(k0_real, LANE)
    x0 = jnp.pad(x0, ((0, 0), (0, k0p - k0_real))).astype(jnp.bfloat16)

    dims = [params[f"w{s}"].shape[1] for s in range(4)]
    cpad = [_ceil_to(d, LANE) for d in dims]

    # Zero-pad weights/biases: lane-dense N, and real K rows of each merge
    # group placed at 128-aligned offsets matching the merged column slabs.
    wp, bp = [], []
    w0p = jnp.zeros((k0p, cpad[0]), jnp.float32)
    w0p = w0p.at[:k0_real, :dims[0]].set(params["w0"])
    wp.append(w0p.astype(jnp.bfloat16))
    for s in range(1, 4):
        w = params[f"w{s}"]
        c_prev, c_prev_pad = dims[s - 1], cpad[s - 1]
        out = jnp.zeros((4 * c_prev_pad, cpad[s]), jnp.float32)
        for j in range(4):
            out = out.at[j * c_prev_pad:j * c_prev_pad + c_prev, :dims[s]].set(
                w[j * c_prev:(j + 1) * c_prev, :])
        wp.append(out.astype(jnp.bfloat16))
    for s in range(4):
        b = params[f"b{s}"]
        bp.append(jnp.zeros((1, cpad[s]), jnp.float32).at[0, :dims[s]].set(b))

    args = [x0]
    in_specs = [pl.BlockSpec((R, k0p), lambda g: (g, 0))]
    for s in range(4):
        args += [wp[s], bp[s]]
        in_specs += [pl.BlockSpec(wp[s].shape, lambda g: (0, 0)),   # resident
                     pl.BlockSpec(bp[s].shape, lambda g: (0, 0))]   # resident

    # Advisory cost estimate (padded dims).
    flops = 2 * B * m * (k0p * cpad[0] + cpad[0] * cpad[1]
                         + (cpad[1] * cpad[2]) // 4 + (cpad[2] * cpad[3]) // 16)
    transc = B * m * (cpad[0] + cpad[1] // 4 + cpad[2] // 16 + cpad[3] // 64)
    bytes_acc = (x0.size * 2 + sum(int(w.size) * 2 for w in wp)
                 + sum(int(b.size) * 4 for b in bp) + B * cpad[3] * 4)

    out = pl.pallas_call(
        _feature_fused_kernel,
        out_shape=jax.ShapeDtypeStruct((G, batch_block, cpad[3]), jnp.float32),
        grid=(G,),
        in_specs=in_specs,
        out_specs=pl.BlockSpec((None, batch_block, cpad[3]),
                               lambda g: (g, 0, 0)),
        compiler_params=pltpu.CompilerParams(
            dimension_semantics=("parallel",)),        # megacore over blocks
        cost_estimate=pl.CostEstimate(flops=int(flops),
                                      transcendentals=int(transc),
                                      bytes_accessed=int(bytes_acc)),
    )(*args)
    return out.reshape(B, cpad[3])[:, :dims[3]]


# --------------------------- params & pure-JAX reference ---------------------

def init_params(key, in_ch=3, dims=(8, 16, 32, 64)):
    """Deterministic synthetic weights for the 4-stage encoder hierarchy."""
    ks = jax.random.split(key, 8)
    in_dims = (in_ch * 16, dims[0] * 4, dims[1] * 4, dims[2] * 4)
    params = {}
    for s in range(4):
        scale = in_dims[s] ** -0.5
        params[f"w{s}"] = scale * jax.random.normal(
            ks[2 * s], (in_dims[s], dims[s]), dtype=jnp.float32)
        params[f"b{s}"] = 0.02 * jax.random.normal(
            ks[2 * s + 1], (dims[s],), dtype=jnp.float32)
    return params


def space_to_depth(x, p):
    B, H, W, C = x.shape
    x = x.reshape(B, H // p, p, W // p, p, C)
    x = x.transpose(0, 1, 3, 2, 4, 5)
    return x.reshape(B, H // p, W // p, p * p * C)


def reference_forward(params, x_nchw):
    """Pure-JAX reference in the standard (row-major space_to_depth) layout,
    with the same bf16 matmul operands as the kernel."""
    x = jnp.transpose(x_nchw, (0, 2, 3, 1)).astype(jnp.float32)
    for s, p in enumerate((4, 2, 2, 2)):
        x = space_to_depth(x, p)
        B, H, W, C = x.shape
        y = jnp.dot(x.reshape(B * H * W, C).astype(jnp.bfloat16),
                    params[f"w{s}"].astype(jnp.bfloat16),
                    preferred_element_type=jnp.float32) + params[f"b{s}"]
        x = _gelu(y).reshape(B, H, W, -1)
    B, H, W, C = x.shape
    return jnp.mean(x.reshape(B, H * W, C), axis=1)


# ------------------------------------ main -----------------------------------

if __name__ == "__main__":
    key = jax.random.PRNGKey(0)
    k_param, k_input = jax.random.split(key)

    params = init_params(k_param, in_ch=3, dims=(8, 16, 32, 64))
    x = jax.random.normal(k_input, (2, 3, 64, 64), dtype=jnp.float32)  # NCHW

    feats = jax.block_until_ready(feature_forward(params, x))

    assert feats.shape == (2, 64), feats.shape
    assert bool(jnp.all(jnp.isfinite(feats)))

    ref = jax.block_until_ready(reference_forward(params, x))
    assert bool(jnp.allclose(feats, ref, rtol=1e-2, atol=1e-3)), (
        float(jnp.max(jnp.abs(feats - ref))))

    print("KERNEL_OK")
</pallas_src>

<mosaic_0001>
module attributes {stable_mosaic.version = 11 : i64} {
  func.func @_feature_fused_kernel(%arg0: i32, %arg1: memref<256x128xbf16, #tpu.memory_space<vmem>>, %arg2: memref<128x128xbf16, #tpu.memory_space<vmem>>, %arg3: memref<1x128xf32, #tpu.memory_space<vmem>>, %arg4: memref<512x128xbf16, #tpu.memory_space<vmem>>, %arg5: memref<1x128xf32, #tpu.memory_space<vmem>>, %arg6: memref<512x128xbf16, #tpu.memory_space<vmem>>, %arg7: memref<1x128xf32, #tpu.memory_space<vmem>>, %arg8: memref<512x128xbf16, #tpu.memory_space<vmem>>, %arg9: memref<1x128xf32, #tpu.memory_space<vmem>>, %arg10: memref<1x1x128xf32, #tpu.memory_space<vmem>>) attributes {dimension_semantics = [#tpu.dimension_semantics<parallel>], iteration_bounds = array<i64: 2>, scalar_prefetch = 0 : i64, scratch_operands = 0 : i64, tpu.core_type = #tpu.core_type<tc>, window_params = [{transform_indices = @transform_0, window_bounds = array<i64: 256, 128>}, {pipeline_mode = #tpu.pipeline_mode<synchronous>, transform_indices = @transform_1, window_bounds = array<i64: 128, 128>}, {pipeline_mode = #tpu.pipeline_mode<synchronous>, transform_indices = @transform_2, window_bounds = array<i64: 1, 128>}, {pipeline_mode = #tpu.pipeline_mode<synchronous>, transform_indices = @transform_3, window_bounds = array<i64: 512, 128>}, {pipeline_mode = #tpu.pipeline_mode<synchronous>, transform_indices = @transform_4, window_bounds = array<i64: 1, 128>}, {pipeline_mode = #tpu.pipeline_mode<synchronous>, transform_indices = @transform_5, window_bounds = array<i64: 512, 128>}, {pipeline_mode = #tpu.pipeline_mode<synchronous>, transform_indices = @transform_6, window_bounds = array<i64: 1, 128>}, {pipeline_mode = #tpu.pipeline_mode<synchronous>, transform_indices = @transform_7, window_bounds = array<i64: 512, 128>}, {pipeline_mode = #tpu.pipeline_mode<synchronous>, transform_indices = @transform_8, window_bounds = array<i64: 1, 128>}, {transform_indices = @transform_9, window_bounds = array<i64: 1, 1, 128>}]} {
    %c0 = arith.constant 0 : index
    %c0_0 = arith.constant 0 : index
    %0 = vector.load %arg1[%c0, %c0_0] : memref<256x128xbf16, #tpu.memory_space<vmem>>, vector<256x128xbf16>
    %c0_1 = arith.constant 0 : index
    %c0_2 = arith.constant 0 : index
    %1 = vector.load %arg2[%c0_1, %c0_2] : memref<128x128xbf16, #tpu.memory_space<vmem>>, vector<128x128xbf16>
    %cst = arith.constant dense<0.000000e+00> : vector<256x128xf32>
    %2 = tpu.matmul %0, %1, %cst {dimension_numbers = #tpu.dot_dimension_numbers<[1], [0], [0], [1], [0, 0, 1, 1], [], []>} : vector<256x128xbf16>, vector<128x128xbf16>, vector<256x128xf32> -> vector<256x128xf32>
    %c0_3 = arith.constant 0 : index
    %c0_4 = arith.constant 0 : index
    %3 = vector.load %arg3[%c0_3, %c0_4] : memref<1x128xf32, #tpu.memory_space<vmem>>, vector<1x128xf32>
    %4 = vector.broadcast %3 : vector<1x128xf32> to vector<256x128xf32>
    %5 = arith.addf %2, %4 : vector<256x128xf32>
    %6 = arith.mulf %5, %5 : vector<256x128xf32>
    %7 = arith.mulf %5, %6 : vector<256x128xf32>
    %cst_5 = arith.constant 4.471500e-02 : f32
    %8 = vector.broadcast %cst_5 : f32 to vector<256x128xf32>
    %9 = arith.mulf %8, %7 : vector<256x128xf32>
    %10 = arith.addf %5, %9 : vector<256x128xf32>
    %cst_6 = arith.constant 0.797884583 : f32
    %11 = vector.broadcast %cst_6 : f32 to vector<256x128xf32>
    %12 = arith.mulf %11, %10 : vector<256x128xf32>
    %13 = math.tanh %12 : vector<256x128xf32>
    %cst_7 = arith.constant 1.000000e+00 : f32
    %14 = vector.broadcast %cst_7 : f32 to vector<256x128xf32>
    %15 = arith.addf %14, %13 : vector<256x128xf32>
    %cst_8 = arith.constant 5.000000e-01 : f32
    %16 = vector.broadcast %cst_8 : f32 to vector<256x128xf32>
    %17 = arith.mulf %16, %15 : vector<256x128xf32>
    %18 = arith.mulf %5, %17 : vector<256x128xf32>
    %19 = vector.extract_strided_slice %18 {offsets = [0, 0], sizes = [64, 128], strides = [1, 1]} : vector<256x128xf32> to vector<64x128xf32>
    %20 = vector.extract_strided_slice %18 {offsets = [64, 0], sizes = [64, 128], strides = [1, 1]} : vector<256x128xf32> to vector<64x128xf32>
    %21 = vector.extract_strided_slice %18 {offsets = [128, 0], sizes = [64, 128], strides = [1, 1]} : vector<256x128xf32> to vector<64x128xf32>
    %22 = vector.extract_strided_slice %18 {offsets = [192, 0], sizes = [64, 128], strides = [1, 1]} : vector<256x128xf32> to vector<64x128xf32>
    %23 = tpu.concatenate %19, %20, %21, %22 in 1 : vector<64x128xf32>, vector<64x128xf32>, vector<64x128xf32>, vector<64x128xf32> -> vector<64x512xf32>
    %24 = arith.truncf %23 : vector<64x512xf32> to vector<64x512xbf16>
    %c0_9 = arith.constant 0 : index
    %c0_10 = arith.constant 0 : index
    %25 = vector.load %arg4[%c0_9, %c0_10] : memref<512x128xbf16, #tpu.memory_space<vmem>>, vector<512x128xbf16>
    %cst_11 = arith.constant dense<0.000000e+00> : vector<64x128xf32>
    %26 = tpu.matmul %24, %25, %cst_11 {dimension_numbers = #tpu.dot_dimension_numbers<[1], [0], [0], [1], [0, 0, 1, 1], [], []>} : vector<64x512xbf16>, vector<512x128xbf16>, vector<64x128xf32> -> vector<64x128xf32>
    %c0_12 = arith.constant 0 : index
    %c0_13 = arith.constant 0 : index
    %27 = vector.load %arg5[%c0_12, %c0_13] : memref<1x128xf32, #tpu.memory_space<vmem>>, vector<1x128xf32>
    %28 = vector.broadcast %27 : vector<1x128xf32> to vector<64x128xf32>
    %29 = arith.addf %26, %28 : vector<64x128xf32>
    %30 = arith.mulf %29, %29 : vector<64x128xf32>
    %31 = arith.mulf %29, %30 : vector<64x128xf32>
    %cst_14 = arith.constant 4.471500e-02 : f32
    %32 = vector.broadcast %cst_14 : f32 to vector<64x128xf32>
    %33 = arith.mulf %32, %31 : vector<64x128xf32>
    %34 = arith.addf %29, %33 : vector<64x128xf32>
    %cst_15 = arith.constant 0.797884583 : f32
    %35 = vector.broadcast %cst_15 : f32 to vector<64x128xf32>
    %36 = arith.mulf %35, %34 : vector<64x128xf32>
    %37 = math.tanh %36 : vector<64x128xf32>
    %cst_16 = arith.constant 1.000000e+00 : f32
    %38 = vector.broadcast %cst_16 : f32 to vector<64x128xf32>
    %39 = arith.addf %38, %37 : vector<64x128xf32>
    %cst_17 = arith.constant 5.000000e-01 : f32
    %40 = vector.broadcast %cst_17 : f32 to vector<64x128xf32>
    %41 = arith.mulf %40, %39 : vector<64x128xf32>
    %42 = arith.mulf %29, %41 : vector<64x128xf32>
    %43 = vector.extract_strided_slice %42 {offsets = [0, 0], sizes = [16, 128], strides = [1, 1]} : vector<64x128xf32> to vector<16x128xf32>
    %44 = vector.extract_strided_slice %42 {offsets = [16, 0], sizes = [16, 128], strides = [1, 1]} : vector<64x128xf32> to vector<16x128xf32>
    %45 = vector.extract_strided_slice %42 {offsets = [32, 0], sizes = [16, 128], strides = [1, 1]} : vector<64x128xf32> to vector<16x128xf32>
    %46 = vector.extract_strided_slice %42 {offsets = [48, 0], sizes = [16, 128], strides = [1, 1]} : vector<64x128xf32> to vector<16x128xf32>
    %47 = tpu.concatenate %43, %44, %45, %46 in 1 : vector<16x128xf32>, vector<16x128xf32>, vector<16x128xf32>, vector<16x128xf32> -> vector<16x512xf32>
    %48 = arith.truncf %47 : vector<16x512xf32> to vector<16x512xbf16>
    %c0_18 = arith.constant 0 : index
    %c0_19 = arith.constant 0 : index
    %49 = vector.load %arg6[%c0_18, %c0_19] : memref<512x128xbf16, #tpu.memory_space<vmem>>, vector<512x128xbf16>
    %cst_20 = arith.constant dense<0.000000e+00> : vector<16x128xf32>
    %50 = tpu.matmul %48, %49, %cst_20 {dimension_numbers = #tpu.dot_dimension_numbers<[1], [0], [0], [1], [0, 0, 1, 1], [], []>} : vector<16x512xbf16>, vector<512x128xbf16>, vector<16x128xf32> -> vector<16x128xf32>
    %c0_21 = arith.constant 0 : index
    %c0_22 = arith.constant 0 : index
    %51 = vector.load %arg7[%c0_21, %c0_22] : memref<1x128xf32, #tpu.memory_space<vmem>>, vector<1x128xf32>
    %52 = vector.broadcast %51 : vector<1x128xf32> to vector<16x128xf32>
    %53 = arith.addf %50, %52 : vector<16x128xf32>
    %54 = arith.mulf %53, %53 : vector<16x128xf32>
    %55 = arith.mulf %53, %54 : vector<16x128xf32>
    %cst_23 = arith.constant 4.471500e-02 : f32
    %56 = vector.broadcast %cst_23 : f32 to vector<16x128xf32>
    %57 = arith.mulf %56, %55 : vector<16x128xf32>
    %58 = arith.addf %53, %57 : vector<16x128xf32>
    %cst_24 = arith.constant 0.797884583 : f32
    %59 = vector.broadcast %cst_24 : f32 to vector<16x128xf32>
    %60 = arith.mulf %59, %58 : vector<16x128xf32>
    %61 = math.tanh %60 : vector<16x128xf32>
    %cst_25 = arith.constant 1.000000e+00 : f32
    %62 = vector.broadcast %cst_25 : f32 to vector<16x128xf32>
    %63 = arith.addf %62, %61 : vector<16x128xf32>
    %cst_26 = arith.constant 5.000000e-01 : f32
    %64 = vector.broadcast %cst_26 : f32 to vector<16x128xf32>
    %65 = arith.mulf %64, %63 : vector<16x128xf32>
    %66 = arith.mulf %53, %65 : vector<16x128xf32>
    %67 = vector.extract_strided_slice %66 {offsets = [0, 0], sizes = [4, 128], strides = [1, 1]} : vector<16x128xf32> to vector<4x128xf32>
    %68 = vector.extract_strided_slice %66 {offsets = [4, 0], sizes = [4, 128], strides = [1, 1]} : vector<16x128xf32> to vector<4x128xf32>
    %69 = vector.extract_strided_slice %66 {offsets = [8, 0], sizes = [4, 128], strides = [1, 1]} : vector<16x128xf32> to vector<4x128xf32>
    %70 = vector.extract_strided_slice %66 {offsets = [12, 0], sizes = [4, 128], strides = [1, 1]} : vector<16x128xf32> to vector<4x128xf32>
    %71 = tpu.concatenate %67, %68, %69, %70 in 1 : vector<4x128xf32>, vector<4x128xf32>, vector<4x128xf32>, vector<4x128xf32> -> vector<4x512xf32>
    %72 = arith.truncf %71 : vector<4x512xf32> to vector<4x512xbf16>
    %c0_27 = arith.constant 0 : index
    %c0_28 = arith.constant 0 : index
    %73 = vector.load %arg8[%c0_27, %c0_28] : memref<512x128xbf16, #tpu.memory_space<vmem>>, vector<512x128xbf16>
    %cst_29 = arith.constant dense<0.000000e+00> : vector<4x128xf32>
    %74 = tpu.matmul %72, %73, %cst_29 {dimension_numbers = #tpu.dot_dimension_numbers<[1], [0], [0], [1], [0, 0, 1, 1], [], []>} : vector<4x512xbf16>, vector<512x128xbf16>, vector<4x128xf32> -> vector<4x128xf32>
    %c0_30 = arith.constant 0 : index
    %c0_31 = arith.constant 0 : index
    %75 = vector.load %arg9[%c0_30, %c0_31] : memref<1x128xf32, #tpu.memory_space<vmem>>, vector<1x128xf32>
    %76 = vector.broadcast %75 : vector<1x128xf32> to vector<4x128xf32>
    %77 = arith.addf %74, %76 : vector<4x128xf32>
    %78 = arith.mulf %77, %77 : vector<4x128xf32>
    %79 = arith.mulf %77, %78 : vector<4x128xf32>
    %cst_32 = arith.constant 4.471500e-02 : f32
    %80 = vector.broadcast %cst_32 : f32 to vector<4x128xf32>
    %81 = arith.mulf %80, %79 : vector<4x128xf32>
    %82 = arith.addf %77, %81 : vector<4x128xf32>
    %cst_33 = arith.constant 0.797884583 : f32
    %83 = vector.broadcast %cst_33 : f32 to vector<4x128xf32>
    %84 = arith.mulf %83, %82 : vector<4x128xf32>
    %85 = math.tanh %84 : vector<4x128xf32>
    %cst_34 = arith.constant 1.000000e+00 : f32
    %86 = vector.broadcast %cst_34 : f32 to vector<4x128xf32>
    %87 = arith.addf %86, %85 : vector<4x128xf32>
    %cst_35 = arith.constant 5.000000e-01 : f32
    %88 = vector.broadcast %cst_35 : f32 to vector<4x128xf32>
    %89 = arith.mulf %88, %87 : vector<4x128xf32>
    %90 = arith.mulf %77, %89 : vector<4x128xf32>
    %91 = vector.shape_cast %90 : vector<4x128xf32> to vector<1x4x128xf32>
    %cst_36 = arith.constant dense<0.000000e+00> : vector<1x128xf32>
    %92 = vector.multi_reduction <add>, %91, %cst_36 [1] : vector<1x4x128xf32> to vector<1x128xf32>
    %cst_37 = arith.constant 4.000000e+00 : f32
    %93 = vector.broadcast %cst_37 : f32 to vector<1x128xf32>
    %94 = arith.divf %92, %93 : vector<1x128xf32>
    %c0_38 = arith.constant 0 : index
    %c0_39 = arith.constant 0 : index
    %c0_40 = arith.constant 0 : index
    %95 = vector.load %arg10[%c0_38, %c0_39, %c0_40] : memref<1x1x128xf32, #tpu.memory_space<vmem>>, vector<1x1x128xf32>
    %96 = vector.shape_cast %95 : vector<1x1x128xf32> to vector<1x128xf32>
    %97 = vector.shape_cast %94 : vector<1x128xf32> to vector<1x1x128xf32>
    tpu.vector_store %arg10[%c0_38, %c0_39, %c0_40], %97 {strides = array<i32>} : memref<1x1x128xf32, #tpu.memory_space<vmem>>, vector<1x1x128xf32>,
    return
  }
  func.func @transform_0(%arg0: i32) -> (i32, i32) {
    %c0_i32 = arith.constant 0 : i32
    %c0_i32_0 = arith.constant 0 : i32
    return %arg0, %c0_i32 : i32, i32
  }
  func.func @transform_1(%arg0: i32) -> (i32, i32) {
    %c0_i32 = arith.constant 0 : i32
    %c0_i32_0 = arith.constant 0 : i32
    %c0_i32_1 = arith.constant 0 : i32
    return %c0_i32, %c0_i32_0 : i32, i32
  }
  func.func @transform_2(%arg0: i32) -> (i32, i32) {
    %c0_i32 = arith.constant 0 : i32
    %c0_i32_0 = arith.constant 0 : i32
    %c0_i32_1 = arith.constant 0 : i32
    return %c0_i32, %c0_i32_0 : i32, i32
  }
  func.func @transform_3(%arg0: i32) -> (i32, i32) {
    %c0_i32 = arith.constant 0 : i32
    %c0_i32_0 = arith.constant 0 : i32
    %c0_i32_1 = arith.constant 0 : i32
    return %c0_i32, %c0_i32_0 : i32, i32
  }
  func.func @transform_4(%arg0: i32) -> (i32, i32) {
    %c0_i32 = arith.constant 0 : i32
    %c0_i32_0 = arith.constant 0 : i32
    %c0_i32_1 = arith.constant 0 : i32
    return %c0_i32, %c0_i32_0 : i32, i32
  }
  func.func @transform_5(%arg0: i32) -> (i32, i32) {
    %c0_i32 = arith.constant 0 : i32
    %c0_i32_0 = arith.constant 0 : i32
    %c0_i32_1 = arith.constant 0 : i32
    return %c0_i32, %c0_i32_0 : i32, i32
  }
  func.func @transform_6(%arg0: i32) -> (i32, i32) {
    %c0_i32 = arith.constant 0 : i32
    %c0_i32_0 = arith.constant 0 : i32
    %c0_i32_1 = arith.constant 0 : i32
    return %c0_i32, %c0_i32_0 : i32, i32
  }
  func.func @transform_7(%arg0: i32) -> (i32, i32) {
    %c0_i32 = arith.constant 0 : i32
    %c0_i32_0 = arith.constant 0 : i32
    %c0_i32_1 = arith.constant 0 : i32
    return %c0_i32, %c0_i32_0 : i32, i32
  }
  func.func @transform_8(%arg0: i32) -> (i32, i32) {
    %c0_i32 = arith.constant 0 : i32
    %c0_i32_0 = arith.constant 0 : i32
    %c0_i32_1 = arith.constant 0 : i32
    return %c0_i32, %c0_i32_0 : i32, i32
  }
  func.func @transform_9(%arg0: i32) -> (i32, i32, i32) {
    %c0_i32 = arith.constant 0 : i32
    %c0_i32_0 = arith.constant 0 : i32
    %c0_i32_1 = arith.constant 0 : i32
    return %arg0, %c0_i32, %c0_i32_0 : i32, i32, i32
  }
}

</mosaic_0001>

<llo_original>
// kernel: tpu_custom_call.1
$region0: #{tpu_custom_call.1}
  #allocation0 [shape = 'u32[]', space=smem, size = 0x4, offset = 0x4, fixed_abs, tag = 'smem constant byte address 0x4 - core index']
  #allocation1 [shape = 'u32[144,128]{1,0:T(1,128)}', space=vmem, size = 0x12000, scoped, tag = 'internal scratch']
  %s0 = inlined_call_operand.hbm [shape: bf16[512,128], index: 0, kind: input, shape index: {}]
  %s1 = inlined_call_operand.hbm [shape: bf16[128,128], index: 1, kind: input, shape index: {}]
  %s2 = inlined_call_operand.vmem [shape: f32[1,128], index: 2, kind: input, shape index: {}]
  %s3 = inlined_call_operand.hbm [shape: bf16[512,128], index: 3, kind: input, shape index: {}]
  %s4 = inlined_call_operand.vmem [shape: f32[1,128], index: 4, kind: input, shape index: {}]
  %s5 = inlined_call_operand.hbm [shape: bf16[512,128], index: 5, kind: input, shape index: {}]
  %s6 = inlined_call_operand.vmem [shape: f32[1,128], index: 6, kind: input, shape index: {}]
  %s7 = inlined_call_operand.hbm [shape: bf16[512,128], index: 7, kind: input, shape index: {}]
  %s8 = inlined_call_operand.vmem [shape: f32[1,128], index: 8, kind: input, shape index: {}]
  %s9 = inlined_call_operand.hbm [shape: f32[2,1,128], index: 9, kind: output, shape index: {}]
  %s10 = sld [smem:[#allocation0]]
  $region89: #{tpu_custom_call.1} parent=0
    _
  %s12 = ssub.s32 1, %s10
  %s13 = scalar_select 0, %s12, %s10
  $region1: #{tpu_custom_call.1} parent=0
    #allocation2 [shape = 'u8[131072]{0}', space=vmem, size = 0x20000, scoped, tag = 'input window, operand 0']
    #allocation3 [shape = 's32[2]{0}', space=sflag, size = 0x8, scoped, tag = 'scoped memory for tpu_custom_call.1']
    #allocation4 [shape = 's32[2]{0}', space=sflag, size = 0x8, scoped, tag = 'scoped memory for tpu_custom_call.1']
    #allocation5 [shape = 'u8[32768]{0}', space=vmem, size = 0x8000, scoped, tag = 'input window, operand 1, single buffered']
    #allocation6 [shape = 's32[1]{0}', space=sflag, size = 0x4, scoped, tag = 'scoped memory for tpu_custom_call.1']
    #allocation7 [shape = 'u8[131072]{0}', space=vmem, size = 0x20000, scoped, tag = 'input window, operand 3, single buffered']
    #allocation8 [shape = 'u8[131072]{0}', space=vmem, size = 0x20000, scoped, tag = 'input window, operand 5, single buffered']
    #allocation9 [shape = 's32[1]{0}', space=sflag, size = 0x4, scoped, tag = 'scoped memory for tpu_custom_call.1']
    #allocation10 [shape = 'u8[131072]{0}', space=vmem, size = 0x20000, scoped, tag = 'input window, operand 7, single buffered']
    #allocation11 [shape = 'u8[1024]{0}', space=vmem, size = 0x400, scoped, tag = 'output window, operand 0']
    %14 = vsyncpa [#allocation3], 0
    %s15 = scalar_lea.sflag [#allocation3], 1
    %16 = vsyncpa %s15, 0
    %17 = vsyncpa [#allocation6], 0
    %18 = vsyncpa [#allocation9], 0
    %19 = vsyncpa [#allocation4], 0
    %s20 = scalar_lea.sflag [#allocation4], 1
    %21 = vsyncpa %s20, 0
    loop: start=0, step=1, limit=4
    $region2: #{tpu_custom_call.1} parent=1 // loop_pre_header
      _
    $region3: #{tpu_custom_call.1} parent=1 // loop_header
      %s23 = sphi 0, %s27
      %p24 = scmp.ge.s32.totalorder %s23, 4
      %s33 = sphi 0, %s35
      %s36 = sphi 0, %s33
      %s37 = sphi 0, %s36
      %s53 = sphi 0, %s37
      %s57 = sphi 0, %s57
      %s59 = sphi 0, %s57
      %s60 = sphi 0, %s59
      %s74 = sphi 0, %s60
      %s78 = sphi 0, %s78
      %s80 = sphi 0, %s78
      %s81 = sphi 0, %s80
      %s95 = sphi 0, %s81
      %s99 = sphi 0, %s99
      %s101 = sphi 0, %s99
      %s102 = sphi 0, %s101
      %s116 = sphi 0, %s102
      %s120 = sphi 0, %s120
      %s122 = sphi 0, %s120
      %s123 = sphi 0, %s122
      %s137 = sphi 0, %s123
      %s141 = sphi 0, %s141
      %s143 = sphi 0, %s141
      %s144 = sphi 0, %s143
      %s158 = sphi 0, %s144
      %s162 = sphi 0, %s162
      %s164 = sphi 0, %s162
      %s165 = sphi 0, %s164
      %s179 = sphi 0, %s165
      %s183 = sphi 0, %s183
      %s185 = sphi 0, %s183
      %s186 = sphi 0, %s185
      %s200 = sphi 0, %s186
      %s204 = sphi 0, %s204
      %s206 = sphi 0, %s204
      %s207 = sphi 0, %s206
      %s221 = sphi 0, %s207
      %s227 = sphi 0, %s229
      %s230 = sphi 0, %s227
      %s231 = sphi 0, %s230
      %s247 = sphi 0, %s231
    $region4: #{tpu_custom_call.1} parent=1 // loop_header_branch
      %26 = sbr.rel (%p24) target = $region8
    $region5: #{tpu_custom_call.1} parent=1 // loop_body
      %s28 = ssub.s32 %s23, 1
      %s29 = ssub.s32 %s23, 2
      %s30 = sadd.s32 %s23, 1
      %s31 = ssub.s32 %s23, %s30
      %p32 = scmp.eq.s32.totalorder %s31, 0
      %s34 = sadd.s32 %s33, 1
      %s35 = scalar_select %p32, %s33, %s34
      %p38 = pneg %p32
      %p39 = scmp.eq.s32.totalorder %s23, 1
      %p40 = por %p38, %p39
      %p41 = scmp.ne.s32.totalorder %s33, %s36
      %p42 = scmp.eq.s32.totalorder %s23, 0
      %p43 = por %p41, %p42
      %p44 = scmp.ne.s32.totalorder %s33, %s36
      %p45 = scmp.eq.s32.totalorder %s28, 1
      %p46 = por %p44, %p45
      %p47 = scmp.ne.s32.totalorder %s36, %s37
      %p48 = scmp.eq.s32.totalorder %s28, 0
      %p49 = por %p47, %p48
      %p50 = scmp.ne.s32.totalorder %s36, %s37
      %p51 = scmp.eq.s32.totalorder %s29, 1
      %p52 = por %p50, %p51
      %p54 = scmp.ne.s32.totalorder %s37, %s53
      %p55 = scmp.eq.s32.totalorder %s29, 0
      %p56 = por %p54, %p55
      %s58 = sadd.s32 %s57, 1
      %p61 = scmp.eq.s32.totalorder %s23, 1
      %p62 = scmp.ne.s32.totalorder %s57, %s59
      %p63 = scmp.eq.s32.totalorder %s23, 0
      %p64 = por %p62, %p63
      %p65 = scmp.ne.s32.totalorder %s57, %s59
      %p66 = scmp.eq.s32.totalorder %s28, 1
      %p67 = por %p65, %p66
      %p68 = scmp.ne.s32.totalorder %s59, %s60
      %p69 = scmp.eq.s32.totalorder %s28, 0
      %p70 = por %p68, %p69
      %p71 = scmp.ne.s32.totalorder %s59, %s60
      %p72 = scmp.eq.s32.totalorder %s29, 1
      %p73 = por %p71, %p72
      %p75 = scmp.ne.s32.totalorder %s60, %s74
      %p76 = scmp.eq.s32.totalorder %s29, 0
      %p77 = por %p75, %p76
      %s79 = sadd.s32 %s78, 1
      %p82 = scmp.eq.s32.totalorder %s23, 1
      %p83 = scmp.ne.s32.totalorder %s78, %s80
      %p84 = scmp.eq.s32.totalorder %s23, 0
      %p85 = por %p83, %p84
      %p86 = scmp.ne.s32.totalorder %s78, %s80
      %p87 = scmp.eq.s32.totalorder %s28, 1
      %p88 = por %p86, %p87
      %p89 = scmp.ne.s32.totalorder %s80, %s81
      %p90 = scmp.eq.s32.totalorder %s28, 0
      %p91 = por %p89, %p90
      %p92 = scmp.ne.s32.totalorder %s80, %s81
      %p93 = scmp.eq.s32.totalorder %s29, 1
      %p94 = por %p92, %p93
      %p96 = scmp.ne.s32.totalorder %s81, %s95
      %p97 = scmp.eq.s32.totalorder %s29, 0
      %p98 = por %p96, %p97
      %s100 = sadd.s32 %s99, 1
      %p103 = scmp.eq.s32.totalorder %s23, 1
      %p104 = scmp.ne.s32.totalorder %s99, %s101
      %p105 = scmp.eq.s32.totalorder %s23, 0
      %p106 = por %p104, %p105
      %p107 = scmp.ne.s32.totalorder %s99, %s101
      %p108 = scmp.eq.s32.totalorder %s28, 1
      %p109 = por %p107, %p108
      %p110 = scmp.ne.s32.totalorder %s101, %s102
      %p111 = scmp.eq.s32.totalorder %s28, 0
      %p112 = por %p110, %p111
      %p113 = scmp.ne.s32.totalorder %s101, %s102
      %p114 = scmp.eq.s32.totalorder %s29, 1
      %p115 = por %p113, %p114
      %p117 = scmp.ne.s32.totalorder %s102, %s116
      %p118 = scmp.eq.s32.totalorder %s29, 0
      %p119 = por %p117, %p118
      %s121 = sadd.s32 %s120, 1
      %p124 = scmp.eq.s32.totalorder %s23, 1
      %p125 = scmp.ne.s32.totalorder %s120, %s122
      %p126 = scmp.eq.s32.totalorder %s23, 0
      %p127 = por %p125, %p126
      %p128 = scmp.ne.s32.totalorder %s120, %s122
      %p129 = scmp.eq.s32.totalorder %s28, 1
      %p130 = por %p128, %p129
      %p131 = scmp.ne.s32.totalorder %s122, %s123
      %p132 = scmp.eq.s32.totalorder %s28, 0
      %p133 = por %p131, %p132
      %p134 = scmp.ne.s32.totalorder %s122, %s123
      %p135 = scmp.eq.s32.totalorder %s29, 1
      %p136 = por %p134, %p135
      %p138 = scmp.ne.s32.totalorder %s123, %s137
      %p139 = scmp.eq.s32.totalorder %s29, 0
      %p140 = por %p138, %p139
      %s142 = sadd.s32 %s141, 1
      %p145 = scmp.eq.s32.totalorder %s23, 1
      %p146 = scmp.ne.s32.totalorder %s141, %s143
      %p147 = scmp.eq.s32.totalorder %s23, 0
      %p148 = por %p146, %p147
      %p149 = scmp.ne.s32.totalorder %s141, %s143
      %p150 = scmp.eq.s32.totalorder %s28, 1
      %p151 = por %p149, %p150
      %p152 = scmp.ne.s32.totalorder %s143, %s144
      %p153 = scmp.eq.s32.totalorder %s28, 0
      %p154 = por %p152, %p153
      %p155 = scmp.ne.s32.totalorder %s143, %s144
      %p156 = scmp.eq.s32.totalorder %s29, 1
      %p157 = por %p155, %p156
      %p159 = scmp.ne.s32.totalorder %s144, %s158
      %p160 = scmp.eq.s32.totalorder %s29, 0
      %p161 = por %p159, %p160
      %s163 = sadd.s32 %s162, 1
      %p166 = scmp.eq.s32.totalorder %s23, 1
      %p167 = scmp.ne.s32.totalorder %s162, %s164
      %p168 = scmp.eq.s32.totalorder %s23, 0
      %p169 = por %p167, %p168
      %p170 = scmp.ne.s32.totalorder %s162, %s164
      %p171 = scmp.eq.s32.totalorder %s28, 1
      %p172 = por %p170, %p171
      %p173 = scmp.ne.s32.totalorder %s164, %s165
      %p174 = scmp.eq.s32.totalorder %s28, 0
      %p175 = por %p173, %p174
      %p176 = scmp.ne.s32.totalorder %s164, %s165
      %p177 = scmp.eq.s32.totalorder %s29, 1
      %p178 = por %p176, %p177
      %p180 = scmp.ne.s32.totalorder %s165, %s179
      %p181 = scmp.eq.s32.totalorder %s29, 0
      %p182 = por %p180, %p181
      %s184 = sadd.s32 %s183, 1
      %p187 = scmp.eq.s32.totalorder %s23, 1
      %p188 = scmp.ne.s32.totalorder %s183, %s185
      %p189 = scmp.eq.s32.totalorder %s23, 0
      %p190 = por %p188, %p189
      %p191 = scmp.ne.s32.totalorder %s183, %s185
      %p192 = scmp.eq.s32.totalorder %s28, 1
      %p193 = por %p191, %p192
      %p194 = scmp.ne.s32.totalorder %s185, %s186
      %p195 = scmp.eq.s32.totalorder %s28, 0
      %p196 = por %p194, %p195
      %p197 = scmp.ne.s32.totalorder %s185, %s186
      %p198 = scmp.eq.s32.totalorder %s29, 1
      %p199 = por %p197, %p198
      %p201 = scmp.ne.s32.totalorder %s186, %s200
      %p202 = scmp.eq.s32.totalorder %s29, 0
      %p203 = por %p201, %p202
      %s205 = sadd.s32 %s204, 1
      %p208 = scmp.eq.s32.totalorder %s23, 1
      %p209 = scmp.ne.s32.totalorder %s204, %s206
      %p210 = scmp.eq.s32.totalorder %s23, 0
      %p211 = por %p209, %p210
      %p212 = scmp.ne.s32.totalorder %s204, %s206
      %p213 = scmp.eq.s32.totalorder %s28, 1
      %p214 = por %p212, %p213
      %p215 = scmp.ne.s32.totalorder %s206, %s207
      %p216 = scmp.eq.s32.totalorder %s28, 0
      %p217 = por %p215, %p216
      %p218 = scmp.ne.s32.totalorder %s206, %s207
      %p219 = scmp.eq.s32.totalorder %s29, 1
      %p220 = por %p218, %p219
      %p222 = scmp.ne.s32.totalorder %s207, %s221
      %p223 = scmp.eq.s32.totalorder %s29, 0
      %p224 = por %p222, %p223
      %s225 = ssub.s32 %s23, %s30
      %p226 = scmp.eq.s32.totalorder %s225, 0
      %s228 = sadd.s32 %s227, 1
      %s229 = scalar_select %p226, %s227, %s228
      %p232 = pneg %p226
      %p233 = scmp.eq.s32.totalorder %s23, 1
      %p234 = por %p232, %p233
      %p235 = scmp.ne.s32.totalorder %s227, %s230
      %p236 = scmp.eq.s32.totalorder %s23, 0
      %p237 = por %p235, %p236
      %p238 = scmp.ne.s32.totalorder %s227, %s230
      %p239 = scmp.eq.s32.totalorder %s28, 1
      %p240 = por %p238, %p239
      %p241 = scmp.ne.s32.totalorder %s230, %s231
      %p242 = scmp.eq.s32.totalorder %s28, 0
      %p243 = por %p241, %p242
      %p244 = scmp.ne.s32.totalorder %s230, %s231
      %p245 = scmp.eq.s32.totalorder %s29, 1
      %p246 = por %p244, %p245
      %p248 = scmp.ne.s32.totalorder %s231, %s247
      %p249 = scmp.eq.s32.totalorder %s29, 0
      %p250 = por %p248, %p249
      %p251 = scmp.le.s32.totalorder 1, %s23
      %p252 = scmp.lt.s32.totalorder %s23, 3
      %p253 = pnand %p251, %p252
      %p254 = pneg %p253
      // Predicated region
      $region9: #{tpu_custom_call.1} parent=5 // pred_check
        _
      $region10: #{tpu_custom_call.1} parent=5 // pred_check_branch
        %256 = sbr.rel (%p253) target = $region12
      $region11: #{tpu_custom_call.1} parent=5 // pred_region
        %s257 = ssub.s32 %s23, 1
        // Predicated region
        $region13: #{tpu_custom_call.1} parent=11 // pred_check
          %p258 = pneg %p70
        $region14: #{tpu_custom_call.1} parent=11 // pred_check_branch
          %260 = sbr.rel (%p258) target = $region16
        $region15: #{tpu_custom_call.1} parent=11 // pred_region
          %s262 = ssub.s32 1024, 1024
          %263 = vsyncadd [#allocation6], %s262
          %s264 = sshll.u32 [#allocation5], 4
          %s265 = int_to_ptr.vmem [resolvable:$true] %s264
          %270 = dma.hbm_to_vmem [thread:$0]  %s1, 1024, %s265, [#allocation6], 64, 64, 4
        $region16: #{tpu_custom_call.1} parent=11 // pred_fallthru
          _
        // Predicated region
        $region17: #{tpu_custom_call.1} parent=11 // pred_check
          %p271 = pneg %p91
        $region18: #{tpu_custom_call.1} parent=11 // pred_check_branch
          %273 = sbr.rel (%p271) target = $region20
        $region19: #{tpu_custom_call.1} parent=11 // pred_region
          _
        $region20: #{tpu_custom_call.1} parent=11 // pred_fallthru
          _
        // Predicated region
        $region21: #{tpu_custom_call.1} parent=11 // pred_check
          %p274 = pneg %p112
        $region22: #{tpu_custom_call.1} parent=11 // pred_check_branch
          %276 = sbr.rel (%p274) target = $region24
        $region23: #{tpu_custom_call.1} parent=11 // pred_region
          %s278 = ssub.s32 4096, 4096
          %279 = vsyncadd [#allocation6], %s278
          %s280 = sshll.u32 [#allocation7], 4
          %s281 = int_to_ptr.vmem [resolvable:$true] %s280
          %286 = dma.hbm_to_vmem [thread:$0]  %s3, 4096, %s281, [#allocation6], 64, 64, 4
        $region24: #{tpu_custom_call.1} parent=11 // pred_fallthru
          _
        // Predicated region
        $region25: #{tpu_custom_call.1} parent=11 // pred_check
          %p287 = pneg %p133
        $region26: #{tpu_custom_call.1} parent=11 // pred_check_branch
          %289 = sbr.rel (%p287) target = $region28
        $region27: #{tpu_custom_call.1} parent=11 // pred_region
          _
        $region28: #{tpu_custom_call.1} parent=11 // pred_fallthru
          _
        // Predicated region
        $region29: #{tpu_custom_call.1} parent=11 // pred_check
          %p290 = pneg %p154
        $region30: #{tpu_custom_call.1} parent=11 // pred_check_branch
          %292 = sbr.rel (%p290) target = $region32
        $region31: #{tpu_custom_call.1} parent=11 // pred_region
          %s294 = ssub.s32 4096, 4096
          %295 = vsyncadd [#allocation9], %s294
          %s296 = sshll.u32 [#allocation8], 4
          %s297 = int_to_ptr.vmem [resolvable:$true] %s296
          %302 = dma.hbm_to_vmem [thread:$0]  %s5, 4096, %s297, [#allocation9], 64, 64, 4
        $region32: #{tpu_custom_call.1} parent=11 // pred_fallthru
          _
        // Predicated region
        $region33: #{tpu_custom_call.1} parent=11 // pred_check
          %p303 = pneg %p175
        $region34: #{tpu_custom_call.1} parent=11 // pred_check_branch
          %305 = sbr.rel (%p303) target = $region36
        $region35: #{tpu_custom_call.1} parent=11 // pred_region
          _
        $region36: #{tpu_custom_call.1} parent=11 // pred_fallthru
          _
        // Predicated region
        $region37: #{tpu_custom_call.1} parent=11 // pred_check
          %p306 = pneg %p196
        $region38: #{tpu_custom_call.1} parent=11 // pred_check_branch
          %308 = sbr.rel (%p306) target = $region40
        $region39: #{tpu_custom_call.1} parent=11 // pred_region
          %s310 = ssub.s32 4096, 4096
          %311 = vsyncadd [#allocation9], %s310
          %s312 = sshll.u32 [#allocation10], 4
          %s313 = int_to_ptr.vmem [resolvable:$true] %s312
          %318 = dma.hbm_to_vmem [thread:$0]  %s7, 4096, %s313, [#allocation9], 64, 64, 4
        $region40: #{tpu_custom_call.1} parent=11 // pred_fallthru
          _
        // Predicated region
        $region41: #{tpu_custom_call.1} parent=11 // pred_check
          %p319 = pneg %p217
        $region42: #{tpu_custom_call.1} parent=11 // pred_check_branch
          %321 = sbr.rel (%p319) target = $region44
        $region43: #{tpu_custom_call.1} parent=11 // pred_region
          _
        $region44: #{tpu_custom_call.1} parent=11 // pred_fallthru
          _
      $region12: #{tpu_custom_call.1} parent=5 // pred_fallthru
        _
      %p322 = scmp.lt.s32.totalorder %s23, 2
      // Predicated region
      $region45: #{tpu_custom_call.1} parent=5 // pred_check
        %p323 = pneg %p322
      $region46: #{tpu_custom_call.1} parent=5 // pred_check_branch
        %325 = sbr.rel (%p323) target = $region48
      $region47: #{tpu_custom_call.1} parent=5 // pred_region
        // Predicated region
        $region49: #{tpu_custom_call.1} parent=47 // pred_check
          %p326 = pneg %p43
        $region50: #{tpu_custom_call.1} parent=47 // pred_check_branch
          %328 = sbr.rel (%p326) target = $region52
        $region51: #{tpu_custom_call.1} parent=47 // pred_region
          %s329 = sand.u32 %s33, 1
          %s330 = scalar_lea.sflag [#allocation3], %s329
          %s331 = sand.u32 %s33, 1
          %s332 = smul.addr %s331, 128
          %s333 = scalar_lea.vmem [#allocation2], %s332
          %s334 = smul.u32 32, %s23
          %s336 = ssub.s32 2048, 2048
          %337 = vsyncadd %s330, %s336
          %s338 = smul.addr %s334, 64
          %s339 = scalar_lea.hbm %s0, %s338
          %s340 = sshll.u32 %s333, 4
          %s341 = int_to_ptr.vmem [resolvable:$true] %s340
          %346 = dma.hbm_to_vmem [thread:$0]  %s339, 2048, %s341, %s330, 64, 64, 4
        $region52: #{tpu_custom_call.1} parent=47 // pred_fallthru
          _
      $region48: #{tpu_custom_call.1} parent=5 // pred_fallthru
        _
      %p347 = scmp.le.s32.totalorder 1, %s23
      %p348 = scmp.lt.s32.totalorder %s23, 3
      %p349 = pnand %p347, %p348
      %p350 = pneg %p349
      // Predicated region
      $region53: #{tpu_custom_call.1} parent=5 // pred_check
        _
      $region54: #{tpu_custom_call.1} parent=5 // pred_check_branch
        %352 = sbr.rel (%p349) target = $region56
      $region55: #{tpu_custom_call.1} parent=5 // pred_region
        %s353 = ssub.s32 %s23, 1
        %s354 = sand.u32 %s36, 1
        %s355 = scalar_lea.sflag [#allocation3], %s354
        %s356 = sand.u32 %s36, 1
        %s357 = smul.addr %s356, 128
        %s358 = scalar_lea.vmem [#allocation2], %s357
        // Predicated region
        $region57: #{tpu_custom_call.1} parent=55 // pred_check
          %p359 = pneg %p49
        $region58: #{tpu_custom_call.1} parent=55 // pred_check_branch
          %361 = sbr.rel (%p359) target = $region60
        $region59: #{tpu_custom_call.1} parent=55 // pred_region
          %362 = dma.done %s355, 2048
        $region60: #{tpu_custom_call.1} parent=55 // pred_fallthru
          _
        // Predicated region
        $region61: #{tpu_custom_call.1} parent=55 // pred_check
          %p363 = pneg %p70
        $region62: #{tpu_custom_call.1} parent=55 // pred_check_branch
          %365 = sbr.rel (%p363) target = $region64
        $region63: #{tpu_custom_call.1} parent=55 // pred_region
          %366 = dma.done [#allocation6], 1024
        $region64: #{tpu_custom_call.1} parent=55 // pred_fallthru
          _
        // Predicated region
        $region65: #{tpu_custom_call.1} parent=55 // pred_check
          %p367 = pneg %p112
        $region66: #{tpu_custom_call.1} parent=55 // pred_check_branch
          %369 = sbr.rel (%p367) target = $region68
        $region67: #{tpu_custom_call.1} parent=55 // pred_region
          %370 = dma.done [#allocation6], 4096
        $region68: #{tpu_custom_call.1} parent=55 // pred_fallthru
          _
        // Predicated region
        $region69: #{tpu_custom_call.1} parent=55 // pred_check
          %p371 = pneg %p154
        $region70: #{tpu_custom_call.1} parent=55 // pred_check_branch
          %373 = sbr.rel (%p371) target = $region72
        $region71: #{tpu_custom_call.1} parent=55 // pred_region
          %374 = dma.done [#allocation9], 4096
        $region72: #{tpu_custom_call.1} parent=55 // pred_fallthru
          _
        // Predicated region
        $region73: #{tpu_custom_call.1} parent=55 // pred_check
          %p375 = pneg %p196
        $region74: #{tpu_custom_call.1} parent=55 // pred_check_branch
          %377 = sbr.rel (%p375) target = $region76
        $region75: #{tpu_custom_call.1} parent=55 // pred_region
          %378 = dma.done [#allocation9], 4096
        $region76: #{tpu_custom_call.1} parent=55 // pred_fallthru
          _
        %s379 = sand.u32 %s36, 1
        %s380 = scalar_lea.sflag [#allocation3], %s379
        %s381 = sand.u32 %s36, 1
        %s382 = smul.addr %s381, 128
        %s383 = scalar_lea.vmem [#allocation2], %s382
        %p384 = pneg %p49
        %p385 = pneg %p46
        %p386 = pneg %p70
        %p387 = pneg %p67
        %p388 = pneg %p91
        %p389 = pneg %p88
        %p390 = pneg %p112
        %p391 = pneg %p109
        %p392 = pneg %p133
        %p393 = pneg %p130
        %p394 = pneg %p154
        %p395 = pneg %p151
        %p396 = pneg %p175
        %p397 = pneg %p172
        %p398 = pneg %p196
        %p399 = pneg %p193
        %p400 = pneg %p217
        %p401 = pneg %p214
        %p402 = pneg %p243
        %p403 = pneg %p240
        %s404 = sand.u32 %s230, 1
        %s405 = scalar_lea.sflag [#allocation4], %s404
        %s406 = sand.u32 %s230, 1
        %s407 = scalar_lea.vmem [#allocation11], %s406
        %s408 = smul.u32 32, %s28
        %v410 = vld [vmem:[%s358] sm:$0xf]
        %v411 = vld [vmem:[%s358 + $0x4] sm:$0xf]
        %v412 = vld [vmem:[%s358 + $0x8] sm:$0xf]
        %v413 = vld [vmem:[%s358 + $0xc] sm:$0xf]
        %v414 = vld [vmem:[%s358 + $0x10] sm:$0xf]
        %v415 = vld [vmem:[%s358 + $0x14] sm:$0xf]
        %v416 = vld [vmem:[%s358 + $0x18] sm:$0xf]
        %v417 = vld [vmem:[%s358 + $0x1c] sm:$0xf]
        %v418 = vld [vmem:[%s358 + $0x20] sm:$0xf]
        %v419 = vld [vmem:[%s358 + $0x24] sm:$0xf]
        %v420 = vld [vmem:[%s358 + $0x28] sm:$0xf]
        %v421 = vld [vmem:[%s358 + $0x2c] sm:$0xf]
        %v422 = vld [vmem:[%s358 + $0x30] sm:$0xf]
        %v423 = vld [vmem:[%s358 + $0x34] sm:$0xf]
        %v424 = vld [vmem:[%s358 + $0x38] sm:$0xf]
        %v425 = vld [vmem:[%s358 + $0x3c] sm:$0xf]
        %v426 = vld [vmem:[%s358 + $0x40] sm:$0xf]
        %v427 = vld [vmem:[%s358 + $0x44] sm:$0xf]
        %v428 = vld [vmem:[%s358 + $0x48] sm:$0xf]
        %v429 = vld [vmem:[%s358 + $0x4c] sm:$0xf]
        %v430 = vld [vmem:[%s358 + $0x50] sm:$0xf]
        %v431 = vld [vmem:[%s358 + $0x54] sm:$0xf]
        %v432 = vld [vmem:[%s358 + $0x58] sm:$0xf]
        %v433 = vld [vmem:[%s358 + $0x5c] sm:$0xf]
        %v434 = vld [vmem:[%s358 + $0x60] sm:$0xf]
        %v435 = vld [vmem:[%s358 + $0x64] sm:$0xf]
        %v436 = vld [vmem:[%s358 + $0x68] sm:$0xf]
        %v437 = vld [vmem:[%s358 + $0x6c] sm:$0xf]
        %v438 = vld [vmem:[%s358 + $0x70] sm:$0xf]
        %v439 = vld [vmem:[%s358 + $0x74] sm:$0xf]
        %v440 = vld [vmem:[%s358 + $0x78] sm:$0xf]
        %v441 = vld [vmem:[%s358 + $0x7c] sm:$0xf]
        %v442 = vld [vmem:[#allocation5] sm:$0xf]
        %v443 = vld [vmem:[#allocation5 + $0x4] sm:$0xf]
        %v444 = vld [vmem:[#allocation5 + $0x8] sm:$0xf]
        %v445 = vld [vmem:[#allocation5 + $0xc] sm:$0xf]
        %v446 = vld [vmem:[#allocation5 + $0x10] sm:$0xf]
        %v447 = vld [vmem:[#allocation5 + $0x14] sm:$0xf]
        %v448 = vld [vmem:[#allocation5 + $0x18] sm:$0xf]
        %v449 = vld [vmem:[#allocation5 + $0x1c] sm:$0xf]
        %v450 = vld [vmem:[#allocation5 + $0x20] sm:$0xf]
        %v451 = vld [vmem:[#allocation5 + $0x24] sm:$0xf]
        %v452 = vld [vmem:[#allocation5 + $0x28] sm:$0xf]
        %v453 = vld [vmem:[#allocation5 + $0x2c] sm:$0xf]
        %v454 = vld [vmem:[#allocation5 + $0x30] sm:$0xf]
        %v455 = vld [vmem:[#allocation5 + $0x34] sm:$0xf]
        %v456 = vld [vmem:[#allocation5 + $0x38] sm:$0xf]
        %v457 = vld [vmem:[#allocation5 + $0x3c] sm:$0xf]
        %v458 = vld [vmem:[%s2] sm:$0x1]
        %v460 = vlaneseq
        %v461 = vshrl.u32 %v460, 7
        %v462 = vsub.s32 0, %v461
        %v463 = vrot.slane %v458, %v462
        %v497 = vunpack.c.l.b16 %v410
        %v498 = vunpack.c.l.b16 %v411
        %v499 = vunpack.c.l.b16 %v412
        %v500 = vunpack.c.l.b16 %v413
        %v501 = vunpack.c.l.b16 %v414
        %v502 = vunpack.c.l.b16 %v415
        %v503 = vunpack.c.l.b16 %v416
        %v504 = vunpack.c.l.b16 %v417
        %v505 = vunpack.c.l.b16 %v418
        %v506 = vunpack.c.l.b16 %v419
        %v507 = vunpack.c.l.b16 %v420
        %v508 = vunpack.c.l.b16 %v421
        %v509 = vunpack.c.l.b16 %v422
        %v510 = vunpack.c.l.b16 %v423
        %v511 = vunpack.c.l.b16 %v424
        %v512 = vunpack.c.l.b16 %v425
        %v513 = vunpack.c.l.b16 %v426
        %v514 = vunpack.c.l.b16 %v427
        %v515 = vunpack.c.l.b16 %v428
        %v516 = vunpack.c.l.b16 %v429
        %v517 = vunpack.c.l.b16 %v430
        %v518 = vunpack.c.l.b16 %v431
        %v519 = vunpack.c.l.b16 %v432
        %v520 = vunpack.c.l.b16 %v433
        %v521 = vunpack.c.l.b16 %v434
        %v522 = vunpack.c.l.b16 %v435
        %v523 = vunpack.c.l.b16 %v436
        %v524 = vunpack.c.l.b16 %v437
        %v525 = vunpack.c.l.b16 %v438
        %v526 = vunpack.c.l.b16 %v439
        %v527 = vunpack.c.l.b16 %v440
        %v528 = vunpack.c.l.b16 %v441
        %v529 = vpack.c.b16 %v498, %v497
        %v530 = vpack.c.b16 %v500, %v499
        %v531 = vpack.c.b16 %v502, %v501
        %v532 = vpack.c.b16 %v504, %v503
        %v533 = vpack.c.b16 %v506, %v505
        %v534 = vpack.c.b16 %v508, %v507
        %v535 = vpack.c.b16 %v510, %v509
        %v536 = vpack.c.b16 %v512, %v511
        %v537 = vpack.c.b16 %v514, %v513
        %v538 = vpack.c.b16 %v516, %v515
        %v539 = vpack.c.b16 %v518, %v517
        %v540 = vpack.c.b16 %v520, %v519
        %v541 = vpack.c.b16 %v522, %v521
        %v542 = vpack.c.b16 %v524, %v523
        %v543 = vpack.c.b16 %v526, %v525
        %v544 = vpack.c.b16 %v528, %v527
        %v577 = vunpack.c.l.b16 %v442
        %v578 = vunpack.c.l.b16 %v443
        %v579 = vunpack.c.l.b16 %v444
        %v580 = vunpack.c.l.b16 %v445
        %v581 = vunpack.c.l.b16 %v446
        %v582 = vunpack.c.l.b16 %v447
        %v583 = vunpack.c.l.b16 %v448
        %v584 = vunpack.c.l.b16 %v449
        %v585 = vunpack.c.l.b16 %v450
        %v586 = vunpack.c.l.b16 %v451
        %v587 = vunpack.c.l.b16 %v452
        %v588 = vunpack.c.l.b16 %v453
        %v589 = vunpack.c.l.b16 %v454
        %v590 = vunpack.c.l.b16 %v455
        %v591 = vunpack.c.l.b16 %v456
        %v592 = vunpack.c.l.b16 %v457
        %v593 = vpack.c.b16 %v578, %v577
        %v594 = vpack.c.b16 %v580, %v579
        %v595 = vpack.c.b16 %v582, %v581
        %v596 = vpack.c.b16 %v584, %v583
        %v597 = vpack.c.b16 %v586, %v585
        %v598 = vpack.c.b16 %v588, %v587
        %v599 = vpack.c.b16 %v590, %v589
        %v600 = vpack.c.b16 %v592, %v591
        %609 = vmatprep.subr.bf16.mxu0 0
        %610 = vmatpush1.bf16.msra.mxu0 %v600
        %611 = vmatprep.subr.bf16.mxu0 0
        %612 = vmatpush1.bf16.msra.mxu0 %v599
        %613 = vmatprep.subr.bf16.mxu0 0
        %614 = vmatpush1.bf16.msra.mxu0 %v598
        %615 = vmatprep.subr.bf16.mxu0 0
        %616 = vmatpush1.bf16.msra.mxu0 %v597
        %617 = vmatprep.subr.bf16.mxu0 0
        %618 = vmatpush1.bf16.msra.mxu0 %v596
        %619 = vmatprep.subr.bf16.mxu0 0
        %620 = vmatpush1.bf16.msra.mxu0 %v595
        %621 = vmatprep.subr.bf16.mxu0 0
        %622 = vmatpush1.bf16.msra.mxu0 %v594
        %623 = vmatprep.subr.bf16.mxu0 0
        %624 = vmatpush1.bf16.msra.mxu0 %v593
        %625 = vmatprep.subr.bf16.mxu0 0
        %626 = vmatpush2.bf16.msra.mxu0 0
        %627 = vmatprep.subr.bf16.mxu0 0
        %628 = vmatpush2.bf16.msra.mxu0 0
        %629 = vmatprep.subr.bf16.mxu0 0
        %630 = vmatpush2.bf16.msra.mxu0 0
        %631 = vmatprep.subr.bf16.mxu0 0
        %632 = vmatpush2.bf16.msra.mxu0 0
        %633 = vmatprep.subr.bf16.mxu0 0
        %634 = vmatpush2.bf16.msra.mxu0 0
        %635 = vmatprep.subr.bf16.mxu0 0
        %636 = vmatpush2.bf16.msra.mxu0 0
        %637 = vmatprep.subr.bf16.mxu0 0
        %638 = vmatpush2.bf16.msra.mxu0 0
        %639 = vmatprep.subr.bf16.mxu0 0
        %640 = vmatpush2.bf16.msra.mxu0 0
        %641 = vmatprep.mubr.bf16.mxu0 0
        %642 = vmatmul.mubr.bf16.gmra.mxu0 %v529
        %v643 = vpop.f32.mrf.mxu0
        %v644 = vadd.f32 %v463, %v643
        %v645 = vpop.f32.mrf.mxu0
        %v646 = vpop.f32.mrf.mxu0
        %v647 = vadd.f32 %v463, %v646
        %v648 = vpop.f32.mrf.mxu0
        %649 = vmatprep.mubr.bf16.mxu0 0
        %650 = vmatmul.mubr.bf16.gmra.mxu0 %v530
        %v651 = vpop.f32.mrf.mxu0
        %v652 = vadd.f32 %v463, %v651
        %v653 = vpop.f32.mrf.mxu0
        %v654 = vpop.f32.mrf.mxu0
        %v655 = vadd.f32 %v463, %v654
        %v656 = vpop.f32.mrf.mxu0
        %657 = vmatprep.mubr.bf16.mxu0 0
        %658 = vmatmul.mubr.bf16.gmra.mxu0 %v531
        %v659 = vpop.f32.mrf.mxu0
        %v660 = vadd.f32 %v463, %v659
        %v661 = vpop.f32.mrf.mxu0
        %v662 = vpop.f32.mrf.mxu0
        %v663 = vadd.f32 %v463, %v662
        %v664 = vpop.f32.mrf.mxu0
        %665 = vmatprep.mubr.bf16.mxu0 0
        %666 = vmatmul.mubr.bf16.gmra.mxu0 %v532
        %v667 = vpop.f32.mrf.mxu0
        %v668 = vadd.f32 %v463, %v667
        %v669 = vpop.f32.mrf.mxu0
        %v670 = vpop.f32.mrf.mxu0
        %v671 = vadd.f32 %v463, %v670
        %v672 = vpop.f32.mrf.mxu0
        %673 = vmatprep.mubr.bf16.mxu0 0
        %674 = vmatmul.mubr.bf16.gmra.mxu0 %v533
        %v675 = vpop.f32.mrf.mxu0
        %v676 = vadd.f32 %v463, %v675
        %v677 = vpop.f32.mrf.mxu0
        %v678 = vpop.f32.mrf.mxu0
        %v679 = vadd.f32 %v463, %v678
        %v680 = vpop.f32.mrf.mxu0
        %681 = vmatprep.mubr.bf16.mxu0 0
        %682 = vmatmul.mubr.bf16.gmra.mxu0 %v534
        %v683 = vpop.f32.mrf.mxu0
        %v684 = vadd.f32 %v463, %v683
        %v685 = vpop.f32.mrf.mxu0
        %v686 = vpop.f32.mrf.mxu0
        %v687 = vadd.f32 %v463, %v686
        %v688 = vpop.f32.mrf.mxu0
        %689 = vmatprep.mubr.bf16.mxu0 0
        %690 = vmatmul.mubr.bf16.gmra.mxu0 %v535
        %v691 = vpop.f32.mrf.mxu0
        %v692 = vadd.f32 %v463, %v691
        %v693 = vpop.f32.mrf.mxu0
        %v694 = vpop.f32.mrf.mxu0
        %v695 = vadd.f32 %v463, %v694
        %v696 = vpop.f32.mrf.mxu0
        %697 = vmatprep.mubr.bf16.mxu0 0
        %698 = vmatmul.mubr.bf16.gmra.mxu0 %v536
        %v699 = vpop.f32.mrf.mxu0
        %v700 = vadd.f32 %v463, %v699
        %v701 = vpop.f32.mrf.mxu0
        %v702 = vpop.f32.mrf.mxu0
        %v703 = vadd.f32 %v463, %v702
        %v704 = vpop.f32.mrf.mxu0
        %705 = vmatprep.mubr.bf16.mxu0 0
        %706 = vmatmul.mubr.bf16.gmra.mxu0 %v537
        %v707 = vpop.f32.mrf.mxu0
        %v708 = vadd.f32 %v463, %v707
        %v709 = vpop.f32.mrf.mxu0
        %v710 = vpop.f32.mrf.mxu0
        %v711 = vadd.f32 %v463, %v710
        %v712 = vpop.f32.mrf.mxu0
        %713 = vmatprep.mubr.bf16.mxu0 0
        %714 = vmatmul.mubr.bf16.gmra.mxu0 %v538
        %v715 = vpop.f32.mrf.mxu0
        %v716 = vadd.f32 %v463, %v715
        %v717 = vpop.f32.mrf.mxu0
        %v718 = vpop.f32.mrf.mxu0
        %v719 = vadd.f32 %v463, %v718
        %v720 = vpop.f32.mrf.mxu0
        %721 = vmatprep.mubr.bf16.mxu0 0
        %722 = vmatmul.mubr.bf16.gmra.mxu0 %v539
        %v723 = vpop.f32.mrf.mxu0
        %v724 = vadd.f32 %v463, %v723
        %v725 = vpop.f32.mrf.mxu0
        %v726 = vpop.f32.mrf.mxu0
        %v727 = vadd.f32 %v463, %v726
        %v728 = vpop.f32.mrf.mxu0
        %729 = vmatprep.mubr.bf16.mxu0 0
        %730 = vmatmul.mubr.bf16.gmra.mxu0 %v540
        %v731 = vpop.f32.mrf.mxu0
        %v732 = vadd.f32 %v463, %v731
        %v733 = vpop.f32.mrf.mxu0
        %v734 = vpop.f32.mrf.mxu0
        %v735 = vadd.f32 %v463, %v734
        %v736 = vpop.f32.mrf.mxu0
        %737 = vmatprep.mubr.bf16.mxu0 0
        %738 = vmatmul.mubr.bf16.gmra.mxu0 %v541
        %v739 = vpop.f32.mrf.mxu0
        %v740 = vadd.f32 %v463, %v739
        %v741 = vpop.f32.mrf.mxu0
        %v742 = vpop.f32.mrf.mxu0
        %v743 = vadd.f32 %v463, %v742
        %v744 = vpop.f32.mrf.mxu0
        %745 = vmatprep.mubr.bf16.mxu0 0
        %746 = vmatmul.mubr.bf16.gmra.mxu0 %v542
        %v747 = vpop.f32.mrf.mxu0
        %v748 = vadd.f32 %v463, %v747
        %v749 = vpop.f32.mrf.mxu0
        %v750 = vpop.f32.mrf.mxu0
        %v751 = vadd.f32 %v463, %v750
        %v752 = vpop.f32.mrf.mxu0
        %753 = vmatprep.mubr.bf16.mxu0 0
        %754 = vmatmul.mubr.bf16.gmra.mxu0 %v543
        %v755 = vpop.f32.mrf.mxu0
        %v756 = vadd.f32 %v463, %v755
        %v757 = vpop.f32.mrf.mxu0
        %v758 = vpop.f32.mrf.mxu0
        %v759 = vadd.f32 %v463, %v758
        %v760 = vpop.f32.mrf.mxu0
        %761 = vmatprep.mubr.bf16.mxu0 0
        %762 = vmatmul.mubr.bf16.gmra.mxu0 %v544
        %v763 = vpop.f32.mrf.mxu0
        %v764 = vadd.f32 %v463, %v763
        %v765 = vpop.f32.mrf.mxu0
        %v766 = vpop.f32.mrf.mxu0
        %v767 = vadd.f32 %v463, %v766
        %v768 = vpop.f32.mrf.mxu0
        %769 = vdwg.mxu0
        %v770 = vmul.f32 %v644, %v644
        %v771 = vmul.f32 %v647, %v647
        %v772 = vmul.f32 %v652, %v652
        %v773 = vmul.f32 %v655, %v655
        %v774 = vmul.f32 %v660, %v660
        %v775 = vmul.f32 %v663, %v663
        %v776 = vmul.f32 %v668, %v668
        %v777 = vmul.f32 %v671, %v671
        %v778 = vmul.f32 %v676, %v676
        %v779 = vmul.f32 %v679, %v679
        %v780 = vmul.f32 %v684, %v684
        %v781 = vmul.f32 %v687, %v687
        %v782 = vmul.f32 %v692, %v692
        %v783 = vmul.f32 %v695, %v695
        %v784 = vmul.f32 %v700, %v700
        %v785 = vmul.f32 %v703, %v703
        %v786 = vmul.f32 %v708, %v708
        %v787 = vmul.f32 %v711, %v711
        %v788 = vmul.f32 %v716, %v716
        %v789 = vmul.f32 %v719, %v719
        %v790 = vmul.f32 %v724, %v724
        %v791 = vmul.f32 %v727, %v727
        %v792 = vmul.f32 %v732, %v732
        %v793 = vmul.f32 %v735, %v735
        %v794 = vmul.f32 %v740, %v740
        %v795 = vmul.f32 %v743, %v743
        %v796 = vmul.f32 %v748, %v748
        %v797 = vmul.f32 %v751, %v751
        %v798 = vmul.f32 %v756, %v756
        %v799 = vmul.f32 %v759, %v759
        %v800 = vmul.f32 %v764, %v764
        %v801 = vmul.f32 %v767, %v767
        %v802 = vmul.f32 %v644, %v770
        %v803 = vmul.f32 %v647, %v771
        %v804 = vmul.f32 %v652, %v772
        %v805 = vmul.f32 %v655, %v773
        %v806 = vmul.f32 %v660, %v774
        %v807 = vmul.f32 %v663, %v775
        %v808 = vmul.f32 %v668, %v776
        %v809 = vmul.f32 %v671, %v777
        %v810 = vmul.f32 %v676, %v778
        %v811 = vmul.f32 %v679, %v779
        %v812 = vmul.f32 %v684, %v780
        %v813 = vmul.f32 %v687, %v781
        %v814 = vmul.f32 %v692, %v782
        %v815 = vmul.f32 %v695, %v783
        %v816 = vmul.f32 %v700, %v784
        %v817 = vmul.f32 %v703, %v785
        %v818 = vmul.f32 %v708, %v786
        %v819 = vmul.f32 %v711, %v787
        %v820 = vmul.f32 %v716, %v788
        %v821 = vmul.f32 %v719, %v789
        %v822 = vmul.f32 %v724, %v790
        %v823 = vmul.f32 %v727, %v791
        %v824 = vmul.f32 %v732, %v792
        %v825 = vmul.f32 %v735, %v793
        %v826 = vmul.f32 %v740, %v794
        %v827 = vmul.f32 %v743, %v795
        %v828 = vmul.f32 %v748, %v796
        %v829 = vmul.f32 %v751, %v797
        %v830 = vmul.f32 %v756, %v798
        %v831 = vmul.f32 %v759, %v799
        %v832 = vmul.f32 %v764, %v800
        %v833 = vmul.f32 %v767, %v801
        %v834 = vmul.f32 %v802, 0.044715
        %v835 = vmul.f32 %v803, 0.044715
        %v836 = vmul.f32 %v804, 0.044715
        %v837 = vmul.f32 %v805, 0.044715
        %v838 = vmul.f32 %v806, 0.044715
        %v839 = vmul.f32 %v807, 0.044715
        %v840 = vmul.f32 %v808, 0.044715
        %v841 = vmul.f32 %v809, 0.044715
        %v842 = vmul.f32 %v810, 0.044715
        %v843 = vmul.f32 %v811, 0.044715
        %v844 = vmul.f32 %v812, 0.044715
        %v845 = vmul.f32 %v813, 0.044715
        %v846 = vmul.f32 %v814, 0.044715
        %v847 = vmul.f32 %v815, 0.044715
        %v848 = vmul.f32 %v816, 0.044715
        %v849 = vmul.f32 %v817, 0.044715
        %v850 = vmul.f32 %v818, 0.044715
        %v851 = vmul.f32 %v819, 0.044715
        %v852 = vmul.f32 %v820, 0.044715
        %v853 = vmul.f32 %v821, 0.044715
        %v854 = vmul.f32 %v822, 0.044715
        %v855 = vmul.f32 %v823, 0.044715
        %v856 = vmul.f32 %v824, 0.044715
        %v857 = vmul.f32 %v825, 0.044715
        %v858 = vmul.f32 %v826, 0.044715
        %v859 = vmul.f32 %v827, 0.044715
        %v860 = vmul.f32 %v828, 0.044715
        %v861 = vmul.f32 %v829, 0.044715
        %v862 = vmul.f32 %v830, 0.044715
        %v863 = vmul.f32 %v831, 0.044715
        %v864 = vmul.f32 %v832, 0.044715
        %v865 = vmul.f32 %v833, 0.044715
        %v866 = vadd.f32 %v644, %v834
        %v867 = vadd.f32 %v647, %v835
        %v868 = vadd.f32 %v652, %v836
        %v869 = vadd.f32 %v655, %v837
        %v870 = vadd.f32 %v660, %v838
        %v871 = vadd.f32 %v663, %v839
        %v872 = vadd.f32 %v668, %v840
        %v873 = vadd.f32 %v671, %v841
        %v874 = vadd.f32 %v676, %v842
        %v875 = vadd.f32 %v679, %v843
        %v876 = vadd.f32 %v684, %v844
        %v877 = vadd.f32 %v687, %v845
        %v878 = vadd.f32 %v692, %v846
        %v879 = vadd.f32 %v695, %v847
        %v880 = vadd.f32 %v700, %v848
        %v881 = vadd.f32 %v703, %v849
        %v882 = vadd.f32 %v708, %v850
        %v883 = vadd.f32 %v711, %v851
        %v884 = vadd.f32 %v716, %v852
        %v885 = vadd.f32 %v719, %v853
        %v886 = vadd.f32 %v724, %v854
        %v887 = vadd.f32 %v727, %v855
        %v888 = vadd.f32 %v732, %v856
        %v889 = vadd.f32 %v735, %v857
        %v890 = vadd.f32 %v740, %v858
        %v891 = vadd.f32 %v743, %v859
        %v892 = vadd.f32 %v748, %v860
        %v893 = vadd.f32 %v751, %v861
        %v894 = vadd.f32 %v756, %v862
        %v895 = vadd.f32 %v759, %v863
        %v896 = vadd.f32 %v764, %v864
        %v897 = vadd.f32 %v767, %v865
        %v898 = vmul.f32 %v866, 0.7978846
        %v899 = vmul.f32 %v867, 0.7978846
        %v900 = vmul.f32 %v868, 0.7978846
        %v901 = vmul.f32 %v869, 0.7978846
        %v902 = vmul.f32 %v870, 0.7978846
        %v903 = vmul.f32 %v871, 0.7978846
        %v904 = vmul.f32 %v872, 0.7978846
        %v905 = vmul.f32 %v873, 0.7978846
        %v906 = vmul.f32 %v874, 0.7978846
        %v907 = vmul.f32 %v875, 0.7978846
        %v908 = vmul.f32 %v876, 0.7978846
        %v909 = vmul.f32 %v877, 0.7978846
        %v910 = vmul.f32 %v878, 0.7978846
        %v911 = vmul.f32 %v879, 0.7978846
        %v912 = vmul.f32 %v880, 0.7978846
        %v913 = vmul.f32 %v881, 0.7978846
        %v914 = vmul.f32 %v882, 0.7978846
        %v915 = vmul.f32 %v883, 0.7978846
        %v916 = vmul.f32 %v884, 0.7978846
        %v917 = vmul.f32 %v885, 0.7978846
        %v918 = vmul.f32 %v886, 0.7978846
        %v919 = vmul.f32 %v887, 0.7978846
        %v920 = vmul.f32 %v888, 0.7978846
        %v921 = vmul.f32 %v889, 0.7978846
        %v922 = vmul.f32 %v890, 0.7978846
        %v923 = vmul.f32 %v891, 0.7978846
        %v924 = vmul.f32 %v892, 0.7978846
        %v925 = vmul.f32 %v893, 0.7978846
        %v926 = vmul.f32 %v894, 0.7978846
        %v927 = vmul.f32 %v895, 0.7978846
        %v928 = vmul.f32 %v896, 0.7978846
        %v929 = vmul.f32 %v897, 0.7978846
        %v930 = vtanh.pop %v898
        %v931 = vtanh.pop %v899
        %v932 = vtanh.pop %v900
        %v933 = vtanh.pop %v901
        %v934 = vtanh.pop %v902
        %v935 = vtanh.pop %v903
        %v936 = vtanh.pop %v904
        %v937 = vtanh.pop %v905
        %v938 = vtanh.pop %v906
        %v939 = vtanh.pop %v907
        %v940 = vtanh.pop %v908
        %v941 = vtanh.pop %v909
        %v942 = vtanh.pop %v910
        %v943 = vtanh.pop %v911
        %v944 = vtanh.pop %v912
        %v945 = vtanh.pop %v913
        %v946 = vtanh.pop %v914
        %v947 = vtanh.pop %v915
        %v948 = vtanh.pop %v916
        %v949 = vtanh.pop %v917
        %v950 = vtanh.pop %v918
        %v951 = vtanh.pop %v919
        %v952 = vtanh.pop %v920
        %v953 = vtanh.pop %v921
        %v954 = vtanh.pop %v922
        %v955 = vtanh.pop %v923
        %v956 = vtanh.pop %v924
        %v957 = vtanh.pop %v925
        %v958 = vtanh.pop %v926
        %v959 = vtanh.pop %v927
        %v960 = vtanh.pop %v928
        %v961 = vtanh.pop %v929
        %v962 = vadd.f32 %v930, 1.0
        %v963 = vadd.f32 %v931, 1.0
        %v964 = vadd.f32 %v932, 1.0
        %v965 = vadd.f32 %v933, 1.0
        %v966 = vadd.f32 %v934, 1.0
        %v967 = vadd.f32 %v935, 1.0
        %v968 = vadd.f32 %v936, 1.0
        %v969 = vadd.f32 %v937, 1.0
        %v970 = vadd.f32 %v938, 1.0
        %v971 = vadd.f32 %v939, 1.0
        %v972 = vadd.f32 %v940, 1.0
        %v973 = vadd.f32 %v941, 1.0
        %v974 = vadd.f32 %v942, 1.0
        %v975 = vadd.f32 %v943, 1.0
        %v976 = vadd.f32 %v944, 1.0
        %v977 = vadd.f32 %v945, 1.0
        %v978 = vadd.f32 %v946, 1.0
        %v979 = vadd.f32 %v947, 1.0
        %v980 = vadd.f32 %v948, 1.0
        %v981 = vadd.f32 %v949, 1.0
        %v982 = vadd.f32 %v950, 1.0
        %v983 = vadd.f32 %v951, 1.0
        %v984 = vadd.f32 %v952, 1.0
        %v985 = vadd.f32 %v953, 1.0
        %v986 = vadd.f32 %v954, 1.0
        %v987 = vadd.f32 %v955, 1.0
        %v988 = vadd.f32 %v956, 1.0
        %v989 = vadd.f32 %v957, 1.0
        %v990 = vadd.f32 %v958, 1.0
        %v991 = vadd.f32 %v959, 1.0
        %v992 = vadd.f32 %v960, 1.0
        %v993 = vadd.f32 %v961, 1.0
        %v994 = vmul.f32 %v962, 0.5
        %v995 = vmul.f32 %v963, 0.5
        %v996 = vmul.f32 %v964, 0.5
        %v997 = vmul.f32 %v965, 0.5
        %v998 = vmul.f32 %v966, 0.5
        %v999 = vmul.f32 %v967, 0.5
        %v1000 = vmul.f32 %v968, 0.5
        %v1001 = vmul.f32 %v969, 0.5
        %v1002 = vmul.f32 %v970, 0.5
        %v1003 = vmul.f32 %v971, 0.5
        %v1004 = vmul.f32 %v972, 0.5
        %v1005 = vmul.f32 %v973, 0.5
        %v1006 = vmul.f32 %v974, 0.5
        %v1007 = vmul.f32 %v975, 0.5
        %v1008 = vmul.f32 %v976, 0.5
        %v1009 = vmul.f32 %v977, 0.5
        %v1010 = vmul.f32 %v978, 0.5
        %v1011 = vmul.f32 %v979, 0.5
        %v1012 = vmul.f32 %v980, 0.5
        %v1013 = vmul.f32 %v981, 0.5
        %v1014 = vmul.f32 %v982, 0.5
        %v1015 = vmul.f32 %v983, 0.5
        %v1016 = vmul.f32 %v984, 0.5
        %v1017 = vmul.f32 %v985, 0.5
        %v1018 = vmul.f32 %v986, 0.5
        %v1019 = vmul.f32 %v987, 0.5
        %v1020 = vmul.f32 %v988, 0.5
        %v1021 = vmul.f32 %v989, 0.5
        %v1022 = vmul.f32 %v990, 0.5
        %v1023 = vmul.f32 %v991, 0.5
        %v1024 = vmul.f32 %v992, 0.5
        %v1025 = vmul.f32 %v993, 0.5
        %v1026 = vmul.f32 %v644, %v994
        %v1027 = vmul.f32 %v647, %v995
        %v1028 = vmul.f32 %v652, %v996
        %v1029 = vmul.f32 %v655, %v997
        %v1030 = vmul.f32 %v660, %v998
        %v1031 = vmul.f32 %v663, %v999
        %v1032 = vmul.f32 %v668, %v1000
        %v1033 = vmul.f32 %v671, %v1001
        %v1034 = vmul.f32 %v676, %v1002
        %v1035 = vmul.f32 %v679, %v1003
        %v1036 = vmul.f32 %v684, %v1004
        %v1037 = vmul.f32 %v687, %v1005
        %v1038 = vmul.f32 %v692, %v1006
        %v1039 = vmul.f32 %v695, %v1007
        %v1040 = vmul.f32 %v700, %v1008
        %v1041 = vmul.f32 %v703, %v1009
        %v1042 = vmul.f32 %v708, %v1010
        %v1043 = vmul.f32 %v711, %v1011
        %v1044 = vmul.f32 %v716, %v1012
        %v1045 = vmul.f32 %v719, %v1013
        %v1046 = vmul.f32 %v724, %v1014
        %v1047 = vmul.f32 %v727, %v1015
        %v1048 = vmul.f32 %v732, %v1016
        %v1049 = vmul.f32 %v735, %v1017
        %v1050 = vmul.f32 %v740, %v1018
        %v1051 = vmul.f32 %v743, %v1019
        %v1052 = vmul.f32 %v748, %v1020
        %v1053 = vmul.f32 %v751, %v1021
        %v1054 = vmul.f32 %v756, %v1022
        %v1055 = vmul.f32 %v759, %v1023
        %v1056 = vmul.f32 %v764, %v1024
        %v1057 = vmul.f32 %v767, %v1025
        %v1058 = vpack.c.bf16 %v1027, %v1026
        %v1059 = vpack.c.bf16 %v1035, %v1034
        %v1060 = vpack.c.bf16 %v1043, %v1042
        %v1061 = vpack.c.bf16 %v1051, %v1050
        %v1062 = vpack.c.bf16 %v1029, %v1028
        %v1063 = vpack.c.bf16 %v1037, %v1036
        %v1064 = vpack.c.bf16 %v1045, %v1044
        %v1065 = vpack.c.bf16 %v1053, %v1052
        %v1066 = vpack.c.bf16 %v1031, %v1030
        %v1067 = vpack.c.bf16 %v1039, %v1038
        %v1068 = vpack.c.bf16 %v1047, %v1046
        %v1069 = vpack.c.bf16 %v1055, %v1054
        %v1070 = vpack.c.bf16 %v1033, %v1032
        %v1071 = vpack.c.bf16 %v1041, %v1040
        %v1072 = vpack.c.bf16 %v1049, %v1048
        %v1073 = vpack.c.bf16 %v1057, %v1056
        %v1074 = vld [vmem:[#allocation7] sm:$0xf]
        %v1075 = vld [vmem:[#allocation7 + $0x4] sm:$0xf]
        %v1076 = vld [vmem:[#allocation7 + $0x8] sm:$0xf]
        %v1077 = vld [vmem:[#allocation7 + $0xc] sm:$0xf]
        %v1078 = vld [vmem:[#allocation7 + $0x10] sm:$0xf]
        %v1079 = vld [vmem:[#allocation7 + $0x14] sm:$0xf]
        %v1080 = vld [vmem:[#allocation7 + $0x18] sm:$0xf]
        %v1081 = vld [vmem:[#allocation7 + $0x1c] sm:$0xf]
        %v1082 = vld [vmem:[#allocation7 + $0x20] sm:$0xf]
        %v1083 = vld [vmem:[#allocation7 + $0x24] sm:$0xf]
        %v1084 = vld [vmem:[#allocation7 + $0x28] sm:$0xf]
        %v1085 = vld [vmem:[#allocation7 + $0x2c] sm:$0xf]
        %v1086 = vld [vmem:[#allocation7 + $0x30] sm:$0xf]
        %v1087 = vld [vmem:[#allocation7 + $0x34] sm:$0xf]
        %v1088 = vld [vmem:[#allocation7 + $0x38] sm:$0xf]
        %v1089 = vld [vmem:[#allocation7 + $0x3c] sm:$0xf]
        %v1090 = vld [vmem:[#allocation7 + $0x40] sm:$0xf]
        %v1091 = vld [vmem:[#allocation7 + $0x44] sm:$0xf]
        %v1092 = vld [vmem:[#allocation7 + $0x48] sm:$0xf]
        %v1093 = vld [vmem:[#allocation7 + $0x4c] sm:$0xf]
        %v1094 = vld [vmem:[#allocation7 + $0x50] sm:$0xf]
        %v1095 = vld [vmem:[#allocation7 + $0x54] sm:$0xf]
        %v1096 = vld [vmem:[#allocation7 + $0x58] sm:$0xf]
        %v1097 = vld [vmem:[#allocation7 + $0x5c] sm:$0xf]
        %v1098 = vld [vmem:[#allocation7 + $0x60] sm:$0xf]
        %v1099 = vld [vmem:[#allocation7 + $0x64] sm:$0xf]
        %v1100 = vld [vmem:[#allocation7 + $0x68] sm:$0xf]
        %v1101 = vld [vmem:[#allocation7 + $0x6c] sm:$0xf]
        %v1102 = vld [vmem:[#allocation7 + $0x70] sm:$0xf]
        %v1103 = vld [vmem:[#allocation7 + $0x74] sm:$0xf]
        %v1104 = vld [vmem:[#allocation7 + $0x78] sm:$0xf]
        %v1105 = vld [vmem:[#allocation7 + $0x7c] sm:$0xf]
        %v1106 = vld [vmem:[#allocation7 + $0x80] sm:$0xf]
        %v1107 = vld [vmem:[#allocation7 + $0x84] sm:$0xf]
        %v1108 = vld [vmem:[#allocation7 + $0x88] sm:$0xf]
        %v1109 = vld [vmem:[#allocation7 + $0x8c] sm:$0xf]
        %v1110 = vld [vmem:[#allocation7 + $0x90] sm:$0xf]
        %v1111 = vld [vmem:[#allocation7 + $0x94] sm:$0xf]
        %v1112 = vld [vmem:[#allocation7 + $0x98] sm:$0xf]
        %v1113 = vld [vmem:[#allocation7 + $0x9c] sm:$0xf]
        %v1114 = vld [vmem:[#allocation7 + $0xa0] sm:$0xf]
        %v1115 = vld [vmem:[#allocation7 + $0xa4] sm:$0xf]
        %v1116 = vld [vmem:[#allocation7 + $0xa8] sm:$0xf]
        %v1117 = vld [vmem:[#allocation7 + $0xac] sm:$0xf]
        %v1118 = vld [vmem:[#allocation7 + $0xb0] sm:$0xf]
        %v1119 = vld [vmem:[#allocation7 + $0xb4] sm:$0xf]
        %v1120 = vld [vmem:[#allocation7 + $0xb8] sm:$0xf]
        %v1121 = vld [vmem:[#allocation7 + $0xbc] sm:$0xf]
        %v1122 = vld [vmem:[#allocation7 + $0xc0] sm:$0xf]
        %v1123 = vld [vmem:[#allocation7 + $0xc4] sm:$0xf]
        %v1124 = vld [vmem:[#allocation7 + $0xc8] sm:$0xf]
        %v1125 = vld [vmem:[#allocation7 + $0xcc] sm:$0xf]
        %v1126 = vld [vmem:[#allocation7 + $0xd0] sm:$0xf]
        %v1127 = vld [vmem:[#allocation7 + $0xd4] sm:$0xf]
        %v1128 = vld [vmem:[#allocation7 + $0xd8] sm:$0xf]
        %v1129 = vld [vmem:[#allocation7 + $0xdc] sm:$0xf]
        %v1130 = vld [vmem:[#allocation7 + $0xe0] sm:$0xf]
        %v1131 = vld [vmem:[#allocation7 + $0xe4] sm:$0xf]
        %v1132 = vld [vmem:[#allocation7 + $0xe8] sm:$0xf]
        %v1133 = vld [vmem:[#allocation7 + $0xec] sm:$0xf]
        %v1134 = vld [vmem:[#allocation7 + $0xf0] sm:$0xf]
        %v1135 = vld [vmem:[#allocation7 + $0xf4] sm:$0xf]
        %v1136 = vld [vmem:[#allocation7 + $0xf8] sm:$0xf]
        %v1137 = vld [vmem:[#allocation7 + $0xfc] sm:$0xf]
        %v1138 = vld [vmem:[%s4] sm:$0x1]
        %v1140 = vlaneseq
        %v1141 = vshrl.u32 %v1140, 7
        %v1142 = vsub.s32 0, %v1141
        %v1143 = vrot.slane %v1138, %v1142
        %v1209 = vunpack.c.l.b16 %v1074
        %v1210 = vunpack.c.l.b16 %v1075
        %v1211 = vunpack.c.l.b16 %v1076
        %v1212 = vunpack.c.l.b16 %v1077
        %v1213 = vunpack.c.l.b16 %v1078
        %v1214 = vunpack.c.l.b16 %v1079
        %v1215 = vunpack.c.l.b16 %v1080
        %v1216 = vunpack.c.l.b16 %v1081
        %v1217 = vunpack.c.l.b16 %v1082
        %v1218 = vunpack.c.l.b16 %v1083
        %v1219 = vunpack.c.l.b16 %v1084
        %v1220 = vunpack.c.l.b16 %v1085
        %v1221 = vunpack.c.l.b16 %v1086
        %v1222 = vunpack.c.l.b16 %v1087
        %v1223 = vunpack.c.l.b16 %v1088
        %v1224 = vunpack.c.l.b16 %v1089
        %v1225 = vunpack.c.l.b16 %v1090
        %v1226 = vunpack.c.l.b16 %v1091
        %v1227 = vunpack.c.l.b16 %v1092
        %v1228 = vunpack.c.l.b16 %v1093
        %v1229 = vunpack.c.l.b16 %v1094
        %v1230 = vunpack.c.l.b16 %v1095
        %v1231 = vunpack.c.l.b16 %v1096
        %v1232 = vunpack.c.l.b16 %v1097
        %v1233 = vunpack.c.l.b16 %v1098
        %v1234 = vunpack.c.l.b16 %v1099
        %v1235 = vunpack.c.l.b16 %v1100
        %v1236 = vunpack.c.l.b16 %v1101
        %v1237 = vunpack.c.l.b16 %v1102
        %v1238 = vunpack.c.l.b16 %v1103
        %v1239 = vunpack.c.l.b16 %v1104
        %v1240 = vunpack.c.l.b16 %v1105
        %v1241 = vunpack.c.l.b16 %v1106
        %v1242 = vunpack.c.l.b16 %v1107
        %v1243 = vunpack.c.l.b16 %v1108
        %v1244 = vunpack.c.l.b16 %v1109
        %v1245 = vunpack.c.l.b16 %v1110
        %v1246 = vunpack.c.l.b16 %v1111
        %v1247 = vunpack.c.l.b16 %v1112
        %v1248 = vunpack.c.l.b16 %v1113
        %v1249 = vunpack.c.l.b16 %v1114
        %v1250 = vunpack.c.l.b16 %v1115
        %v1251 = vunpack.c.l.b16 %v1116
        %v1252 = vunpack.c.l.b16 %v1117
        %v1253 = vunpack.c.l.b16 %v1118
        %v1254 = vunpack.c.l.b16 %v1119
        %v1255 = vunpack.c.l.b16 %v1120
        %v1256 = vunpack.c.l.b16 %v1121
        %v1257 = vunpack.c.l.b16 %v1122
        %v1258 = vunpack.c.l.b16 %v1123
        %v1259 = vunpack.c.l.b16 %v1124
        %v1260 = vunpack.c.l.b16 %v1125
        %v1261 = vunpack.c.l.b16 %v1126
        %v1262 = vunpack.c.l.b16 %v1127
        %v1263 = vunpack.c.l.b16 %v1128
        %v1264 = vunpack.c.l.b16 %v1129
        %v1265 = vunpack.c.l.b16 %v1130
        %v1266 = vunpack.c.l.b16 %v1131
        %v1267 = vunpack.c.l.b16 %v1132
        %v1268 = vunpack.c.l.b16 %v1133
        %v1269 = vunpack.c.l.b16 %v1134
        %v1270 = vunpack.c.l.b16 %v1135
        %v1271 = vunpack.c.l.b16 %v1136
        %v1272 = vunpack.c.l.b16 %v1137
        %v1273 = vpack.c.b16 %v1210, %v1209
        %v1274 = vpack.c.b16 %v1212, %v1211
        %v1275 = vpack.c.b16 %v1214, %v1213
        %v1276 = vpack.c.b16 %v1216, %v1215
        %v1277 = vpack.c.b16 %v1218, %v1217
        %v1278 = vpack.c.b16 %v1220, %v1219
        %v1279 = vpack.c.b16 %v1222, %v1221
        %v1280 = vpack.c.b16 %v1224, %v1223
        %v1281 = vpack.c.b16 %v1226, %v1225
        %v1282 = vpack.c.b16 %v1228, %v1227
        %v1283 = vpack.c.b16 %v1230, %v1229
        %v1284 = vpack.c.b16 %v1232, %v1231
        %v1285 = vpack.c.b16 %v1234, %v1233
        %v1286 = vpack.c.b16 %v1236, %v1235
        %v1287 = vpack.c.b16 %v1238, %v1237
        %v1288 = vpack.c.b16 %v1240, %v1239
        %v1289 = vpack.c.b16 %v1242, %v1241
        %v1290 = vpack.c.b16 %v1244, %v1243
        %v1291 = vpack.c.b16 %v1246, %v1245
        %v1292 = vpack.c.b16 %v1248, %v1247
        %v1293 = vpack.c.b16 %v1250, %v1249
        %v1294 = vpack.c.b16 %v1252, %v1251
        %v1295 = vpack.c.b16 %v1254, %v1253
        %v1296 = vpack.c.b16 %v1256, %v1255
        %v1297 = vpack.c.b16 %v1258, %v1257
        %v1298 = vpack.c.b16 %v1260, %v1259
        %v1299 = vpack.c.b16 %v1262, %v1261
        %v1300 = vpack.c.b16 %v1264, %v1263
        %v1301 = vpack.c.b16 %v1266, %v1265
        %v1302 = vpack.c.b16 %v1268, %v1267
        %v1303 = vpack.c.b16 %v1270, %v1269
        %v1304 = vpack.c.b16 %v1272, %v1271
        %1337 = vmatprep.subr.bf16.mxu0 0
        %1338 = vmatpush1.bf16.msra.mxu0 %v1280
        %1339 = vmatprep.subr.bf16.mxu0 0
        %1340 = vmatpush1.bf16.msra.mxu0 %v1279
        %1341 = vmatprep.subr.bf16.mxu0 0
        %1342 = vmatpush1.bf16.msra.mxu0 %v1278
        %1343 = vmatprep.subr.bf16.mxu0 0
        %1344 = vmatpush1.bf16.msra.mxu0 %v1277
        %1345 = vmatprep.subr.bf16.mxu0 0
        %1346 = vmatpush1.bf16.msra.mxu0 %v1276
        %1347 = vmatprep.subr.bf16.mxu0 0
        %1348 = vmatpush1.bf16.msra.mxu0 %v1275
        %1349 = vmatprep.subr.bf16.mxu0 0
        %1350 = vmatpush1.bf16.msra.mxu0 %v1274
        %1351 = vmatprep.subr.bf16.mxu0 0
        %1352 = vmatpush1.bf16.msra.mxu0 %v1273
        %1353 = vmatprep.subr.bf16.mxu0 0
        %1354 = vmatpush2.bf16.msra.mxu0 %v1288
        %1355 = vmatprep.subr.bf16.mxu0 0
        %1356 = vmatpush2.bf16.msra.mxu0 %v1287
        %1357 = vmatprep.subr.bf16.mxu0 0
        %1358 = vmatpush2.bf16.msra.mxu0 %v1286
        %1359 = vmatprep.subr.bf16.mxu0 0
        %1360 = vmatpush2.bf16.msra.mxu0 %v1285
        %1361 = vmatprep.subr.bf16.mxu0 0
        %1362 = vmatpush2.bf16.msra.mxu0 %v1284
        %1363 = vmatprep.subr.bf16.mxu0 0
        %1364 = vmatpush2.bf16.msra.mxu0 %v1283
        %1365 = vmatprep.subr.bf16.mxu0 0
        %1366 = vmatpush2.bf16.msra.mxu0 %v1282
        %1367 = vmatprep.subr.bf16.mxu0 0
        %1368 = vmatpush2.bf16.msra.mxu0 %v1281
        %1369 = vmatprep.mubr.bf16.mxu0 %v1059
        %1370 = vmatmul.mubr.bf16.gmra.mxu0 %v1058
        %v1371 = vpop.f32.mrf.mxu0
        %v1372 = vadd.f32 %v1143, %v1371
        %v1373 = vpop.f32.mrf.mxu0
        %v1374 = vpop.f32.mrf.mxu0
        %v1375 = vadd.f32 %v1143, %v1374
        %v1376 = vpop.f32.mrf.mxu0
        %1377 = vmatprep.mubr.bf16.mxu0 %v1063
        %1378 = vmatmul.mubr.bf16.gmra.mxu0 %v1062
        %v1379 = vpop.f32.mrf.mxu0
        %v1380 = vadd.f32 %v1143, %v1379
        %v1381 = vpop.f32.mrf.mxu0
        %v1382 = vpop.f32.mrf.mxu0
        %v1383 = vadd.f32 %v1143, %v1382
        %v1384 = vpop.f32.mrf.mxu0
        %1385 = vmatprep.mubr.bf16.mxu0 %v1067
        %1386 = vmatmul.mubr.bf16.gmra.mxu0 %v1066
        %v1387 = vpop.f32.mrf.mxu0
        %v1388 = vadd.f32 %v1143, %v1387
        %v1389 = vpop.f32.mrf.mxu0
        %v1390 = vpop.f32.mrf.mxu0
        %v1391 = vadd.f32 %v1143, %v1390
        %v1392 = vpop.f32.mrf.mxu0
        %1393 = vmatprep.mubr.bf16.mxu0 %v1071
        %1394 = vmatmul.mubr.bf16.gmra.mxu0 %v1070
        %v1395 = vpop.f32.mrf.mxu0
        %v1396 = vadd.f32 %v1143, %v1395
        %v1397 = vpop.f32.mrf.mxu0
        %v1398 = vpop.f32.mrf.mxu0
        %v1399 = vadd.f32 %v1143, %v1398
        %v1400 = vpop.f32.mrf.mxu0
        %1401 = vdwg.mxu0
        %1402 = vmatprep.subr.bf16.mxu0 0
        %1403 = vmatpush1.bf16.msra.mxu0 %v1296
        %1404 = vmatprep.subr.bf16.mxu0 0
        %1405 = vmatpush1.bf16.msra.mxu0 %v1295
        %1406 = vmatprep.subr.bf16.mxu0 0
        %1407 = vmatpush1.bf16.msra.mxu0 %v1294
        %1408 = vmatprep.subr.bf16.mxu0 0
        %1409 = vmatpush1.bf16.msra.mxu0 %v1293
        %1410 = vmatprep.subr.bf16.mxu0 0
        %1411 = vmatpush1.bf16.msra.mxu0 %v1292
        %1412 = vmatprep.subr.bf16.mxu0 0
        %1413 = vmatpush1.bf16.msra.mxu0 %v1291
        %1414 = vmatprep.subr.bf16.mxu0 0
        %1415 = vmatpush1.bf16.msra.mxu0 %v1290
        %1416 = vmatprep.subr.bf16.mxu0 0
        %1417 = vmatpush1.bf16.msra.mxu0 %v1289
        %1418 = vmatprep.subr.bf16.mxu0 0
        %1419 = vmatpush2.bf16.msra.mxu0 %v1304
        %1420 = vmatprep.subr.bf16.mxu0 0
        %1421 = vmatpush2.bf16.msra.mxu0 %v1303
        %1422 = vmatprep.subr.bf16.mxu0 0
        %1423 = vmatpush2.bf16.msra.mxu0 %v1302
        %1424 = vmatprep.subr.bf16.mxu0 0
        %1425 = vmatpush2.bf16.msra.mxu0 %v1301
        %1426 = vmatprep.subr.bf16.mxu0 0
        %1427 = vmatpush2.bf16.msra.mxu0 %v1300
        %1428 = vmatprep.subr.bf16.mxu0 0
        %1429 = vmatpush2.bf16.msra.mxu0 %v1299
        %1430 = vmatprep.subr.bf16.mxu0 0
        %1431 = vmatpush2.bf16.msra.mxu0 %v1298
        %1432 = vmatprep.subr.bf16.mxu0 0
        %1433 = vmatpush2.bf16.msra.mxu0 %v1297
        %1434 = vmatprep.mubr.bf16.mxu0 %v1061
        %1435 = vmatmul.mubr.bf16.gmra.mxu0 %v1060
        %v1436 = vpop.f32.mrf.mxu0
        %v1437 = vadd.f32 %v1372, %v1436
        %v1438 = vpop.f32.mrf.mxu0
        %v1439 = vpop.f32.mrf.mxu0
        %v1440 = vadd.f32 %v1375, %v1439
        %v1441 = vpop.f32.mrf.mxu0
        %1442 = vmatprep.mubr.bf16.mxu0 %v1065
        %1443 = vmatmul.mubr.bf16.gmra.mxu0 %v1064
        %v1444 = vpop.f32.mrf.mxu0
        %v1445 = vadd.f32 %v1380, %v1444
        %v1446 = vpop.f32.mrf.mxu0
        %v1447 = vpop.f32.mrf.mxu0
        %v1448 = vadd.f32 %v1383, %v1447
        %v1449 = vpop.f32.mrf.mxu0
        %1450 = vmatprep.mubr.bf16.mxu0 %v1069
        %1451 = vmatmul.mubr.bf16.gmra.mxu0 %v1068
        %v1452 = vpop.f32.mrf.mxu0
        %v1453 = vadd.f32 %v1388, %v1452
        %v1454 = vpop.f32.mrf.mxu0
        %v1455 = vpop.f32.mrf.mxu0
        %v1456 = vadd.f32 %v1391, %v1455
        %v1457 = vpop.f32.mrf.mxu0
        %1458 = vmatprep.mubr.bf16.mxu0 %v1073
        %1459 = vmatmul.mubr.bf16.gmra.mxu0 %v1072
        %v1460 = vpop.f32.mrf.mxu0
        %v1461 = vadd.f32 %v1396, %v1460
        %v1462 = vpop.f32.mrf.mxu0
        %v1463 = vpop.f32.mrf.mxu0
        %v1464 = vadd.f32 %v1399, %v1463
        %v1465 = vpop.f32.mrf.mxu0
        %1466 = vdwg.mxu0
        %v1467 = vmul.f32 %v1437, %v1437
        %v1468 = vmul.f32 %v1440, %v1440
        %v1469 = vmul.f32 %v1445, %v1445
        %v1470 = vmul.f32 %v1448, %v1448
        %v1471 = vmul.f32 %v1453, %v1453
        %v1472 = vmul.f32 %v1456, %v1456
        %v1473 = vmul.f32 %v1461, %v1461
        %v1474 = vmul.f32 %v1464, %v1464
        %v1475 = vmul.f32 %v1437, %v1467
        %v1476 = vmul.f32 %v1440, %v1468
        %v1477 = vmul.f32 %v1445, %v1469
        %v1478 = vmul.f32 %v1448, %v1470
        %v1479 = vmul.f32 %v1453, %v1471
        %v1480 = vmul.f32 %v1456, %v1472
        %v1481 = vmul.f32 %v1461, %v1473
        %v1482 = vmul.f32 %v1464, %v1474
        %v1483 = vmul.f32 %v1475, 0.044715
        %v1484 = vmul.f32 %v1476, 0.044715
        %v1485 = vmul.f32 %v1477, 0.044715
        %v1486 = vmul.f32 %v1478, 0.044715
        %v1487 = vmul.f32 %v1479, 0.044715
        %v1488 = vmul.f32 %v1480, 0.044715
        %v1489 = vmul.f32 %v1481, 0.044715
        %v1490 = vmul.f32 %v1482, 0.044715
        %v1491 = vadd.f32 %v1437, %v1483
        %v1492 = vadd.f32 %v1440, %v1484
        %v1493 = vadd.f32 %v1445, %v1485
        %v1494 = vadd.f32 %v1448, %v1486
        %v1495 = vadd.f32 %v1453, %v1487
        %v1496 = vadd.f32 %v1456, %v1488
        %v1497 = vadd.f32 %v1461, %v1489
        %v1498 = vadd.f32 %v1464, %v1490
        %v1499 = vmul.f32 %v1491, 0.7978846
        %v1500 = vmul.f32 %v1492, 0.7978846
        %v1501 = vmul.f32 %v1493, 0.7978846
        %v1502 = vmul.f32 %v1494, 0.7978846
        %v1503 = vmul.f32 %v1495, 0.7978846
        %v1504 = vmul.f32 %v1496, 0.7978846
        %v1505 = vmul.f32 %v1497, 0.7978846
        %v1506 = vmul.f32 %v1498, 0.7978846
        %v1507 = vtanh.pop %v1499
        %v1508 = vtanh.pop %v1500
        %v1509 = vtanh.pop %v1501
        %v1510 = vtanh.pop %v1502
        %v1511 = vtanh.pop %v1503
        %v1512 = vtanh.pop %v1504
        %v1513 = vtanh.pop %v1505
        %v1514 = vtanh.pop %v1506
        %v1515 = vadd.f32 %v1507, 1.0
        %v1516 = vadd.f32 %v1508, 1.0
        %v1517 = vadd.f32 %v1509, 1.0
        %v1518 = vadd.f32 %v1510, 1.0
        %v1519 = vadd.f32 %v1511, 1.0
        %v1520 = vadd.f32 %v1512, 1.0
        %v1521 = vadd.f32 %v1513, 1.0
        %v1522 = vadd.f32 %v1514, 1.0
        %v1523 = vmul.f32 %v1515, 0.5
        %v1524 = vmul.f32 %v1516, 0.5
        %v1525 = vmul.f32 %v1517, 0.5
        %v1526 = vmul.f32 %v1518, 0.5
        %v1527 = vmul.f32 %v1519, 0.5
        %v1528 = vmul.f32 %v1520, 0.5
        %v1529 = vmul.f32 %v1521, 0.5
        %v1530 = vmul.f32 %v1522, 0.5
        %v1531 = vmul.f32 %v1437, %v1523
        %v1532 = vmul.f32 %v1440, %v1524
        %v1533 = vmul.f32 %v1445, %v1525
        %v1534 = vmul.f32 %v1448, %v1526
        %v1535 = vmul.f32 %v1453, %v1527
        %v1536 = vmul.f32 %v1456, %v1528
        %v1537 = vmul.f32 %v1461, %v1529
        %v1538 = vmul.f32 %v1464, %v1530
        %v1539 = vpack.c.bf16 %v1532, %v1531
        %v1540 = vpack.c.bf16 %v1534, %v1533
        %v1541 = vpack.c.bf16 %v1536, %v1535
        %v1542 = vpack.c.bf16 %v1538, %v1537
        %v1543 = vld [vmem:[#allocation8] sm:$0xf]
        %v1544 = vld [vmem:[#allocation8 + $0x4] sm:$0xf]
        %v1545 = vld [vmem:[#allocation8 + $0x8] sm:$0xf]
        %v1546 = vld [vmem:[#allocation8 + $0xc] sm:$0xf]
        %v1547 = vld [vmem:[#allocation8 + $0x10] sm:$0xf]
        %v1548 = vld [vmem:[#allocation8 + $0x14] sm:$0xf]
        %v1549 = vld [vmem:[#allocation8 + $0x18] sm:$0xf]
        %v1550 = vld [vmem:[#allocation8 + $0x1c] sm:$0xf]
        %v1551 = vld [vmem:[#allocation8 + $0x20] sm:$0xf]
        %v1552 = vld [vmem:[#allocation8 + $0x24] sm:$0xf]
        %v1553 = vld [vmem:[#allocation8 + $0x28] sm:$0xf]
        %v1554 = vld [vmem:[#allocation8 + $0x2c] sm:$0xf]
        %v1555 = vld [vmem:[#allocation8 + $0x30] sm:$0xf]
        %v1556 = vld [vmem:[#allocation8 + $0x34] sm:$0xf]
        %v1557 = vld [vmem:[#allocation8 + $0x38] sm:$0xf]
        %v1558 = vld [vmem:[#allocation8 + $0x3c] sm:$0xf]
        %v1559 = vld [vmem:[#allocation8 + $0x40] sm:$0xf]
        %v1560 = vld [vmem:[#allocation8 + $0x44] sm:$0xf]
        %v1561 = vld [vmem:[#allocation8 + $0x48] sm:$0xf]
        %v1562 = vld [vmem:[#allocation8 + $0x4c] sm:$0xf]
        %v1563 = vld [vmem:[#allocation8 + $0x50] sm:$0xf]
        %v1564 = vld [vmem:[#allocation8 + $0x54] sm:$0xf]
        %v1565 = vld [vmem:[#allocation8 + $0x58] sm:$0xf]
        %v1566 = vld [vmem:[#allocation8 + $0x5c] sm:$0xf]
        %v1567 = vld [vmem:[#allocation8 + $0x60] sm:$0xf]
        %v1568 = vld [vmem:[#allocation8 + $0x64] sm:$0xf]
        %v1569 = vld [vmem:[#allocation8 + $0x68] sm:$0xf]
        %v1570 = vld [vmem:[#allocation8 + $0x6c] sm:$0xf]
        %v1571 = vld [vmem:[#allocation8 + $0x70] sm:$0xf]
        %v1572 = vld [vmem:[#allocation8 + $0x74] sm:$0xf]
        %v1573 = vld [vmem:[#allocation8 + $0x78] sm:$0xf]
        %v1574 = vld [vmem:[#allocation8 + $0x7c] sm:$0xf]
        %v1575 = vld [vmem:[#allocation8 + $0x80] sm:$0xf]
        %v1576 = vld [vmem:[#allocation8 + $0x84] sm:$0xf]
        %v1577 = vld [vmem:[#allocation8 + $0x88] sm:$0xf]
        %v1578 = vld [vmem:[#allocation8 + $0x8c] sm:$0xf]
        %v1579 = vld [vmem:[#allocation8 + $0x90] sm:$0xf]
        %v1580 = vld [vmem:[#allocation8 + $0x94] sm:$0xf]
        %v1581 = vld [vmem:[#allocation8 + $0x98] sm:$0xf]
        %v1582 = vld [vmem:[#allocation8 + $0x9c] sm:$0xf]
        %v1583 = vld [vmem:[#allocation8 + $0xa0] sm:$0xf]
        %v1584 = vld [vmem:[#allocation8 + $0xa4] sm:$0xf]
        %v1585 = vld [vmem:[#allocation8 + $0xa8] sm:$0xf]
        %v1586 = vld [vmem:[#allocation8 + $0xac] sm:$0xf]
        %v1587 = vld [vmem:[#allocation8 + $0xb0] sm:$0xf]
        %v1588 = vld [vmem:[#allocation8 + $0xb4] sm:$0xf]
        %v1589 = vld [vmem:[#allocation8 + $0xb8] sm:$0xf]
        %v1590 = vld [vmem:[#allocation8 + $0xbc] sm:$0xf]
        %v1591 = vld [vmem:[#allocation8 + $0xc0] sm:$0xf]
        %v1592 = vld [vmem:[#allocation8 + $0xc4] sm:$0xf]
        %v1593 = vld [vmem:[#allocation8 + $0xc8] sm:$0xf]
        %v1594 = vld [vmem:[#allocation8 + $0xcc] sm:$0xf]
        %v1595 = vld [vmem:[#allocation8 + $0xd0] sm:$0xf]
        %v1596 = vld [vmem:[#allocation8 + $0xd4] sm:$0xf]
        %v1597 = vld [vmem:[#allocation8 + $0xd8] sm:$0xf]
        %v1598 = vld [vmem:[#allocation8 + $0xdc] sm:$0xf]
        %v1599 = vld [vmem:[#allocation8 + $0xe0] sm:$0xf]
        %v1600 = vld [vmem:[#allocation8 + $0xe4] sm:$0xf]
        %v1601 = vld [vmem:[#allocation8 + $0xe8] sm:$0xf]
        %v1602 = vld [vmem:[#allocation8 + $0xec] sm:$0xf]
        %v1603 = vld [vmem:[#allocation8 + $0xf0] sm:$0xf]
        %v1604 = vld [vmem:[#allocation8 + $0xf4] sm:$0xf]
        %v1605 = vld [vmem:[#allocation8 + $0xf8] sm:$0xf]
        %v1606 = vld [vmem:[#allocation8 + $0xfc] sm:$0xf]
        %v1607 = vld [vmem:[%s6] sm:$0x1]
        %v1609 = vlaneseq
        %v1610 = vshrl.u32 %v1609, 7
        %v1611 = vsub.s32 0, %v1610
        %v1612 = vrot.slane %v1607, %v1611
        %v1678 = vunpack.c.l.b16 %v1543
        %v1679 = vunpack.c.l.b16 %v1544
        %v1680 = vunpack.c.l.b16 %v1545
        %v1681 = vunpack.c.l.b16 %v1546
        %v1682 = vunpack.c.l.b16 %v1547
        %v1683 = vunpack.c.l.b16 %v1548
        %v1684 = vunpack.c.l.b16 %v1549
        %v1685 = vunpack.c.l.b16 %v1550
        %v1686 = vunpack.c.l.b16 %v1551
        %v1687 = vunpack.c.l.b16 %v1552
        %v1688 = vunpack.c.l.b16 %v1553
        %v1689 = vunpack.c.l.b16 %v1554
        %v1690 = vunpack.c.l.b16 %v1555
        %v1691 = vunpack.c.l.b16 %v1556
        %v1692 = vunpack.c.l.b16 %v1557
        %v1693 = vunpack.c.l.b16 %v1558
        %v1694 = vunpack.c.l.b16 %v1559
        %v1695 = vunpack.c.l.b16 %v1560
        %v1696 = vunpack.c.l.b16 %v1561
        %v1697 = vunpack.c.l.b16 %v1562
        %v1698 = vunpack.c.l.b16 %v1563
        %v1699 = vunpack.c.l.b16 %v1564
        %v1700 = vunpack.c.l.b16 %v1565
        %v1701 = vunpack.c.l.b16 %v1566
        %v1702 = vunpack.c.l.b16 %v1567
        %v1703 = vunpack.c.l.b16 %v1568
        %v1704 = vunpack.c.l.b16 %v1569
        %v1705 = vunpack.c.l.b16 %v1570
        %v1706 = vunpack.c.l.b16 %v1571
        %v1707 = vunpack.c.l.b16 %v1572
        %v1708 = vunpack.c.l.b16 %v1573
        %v1709 = vunpack.c.l.b16 %v1574
        %v1710 = vunpack.c.l.b16 %v1575
        %v1711 = vunpack.c.l.b16 %v1576
        %v1712 = vunpack.c.l.b16 %v1577
        %v1713 = vunpack.c.l.b16 %v1578
        %v1714 = vunpack.c.l.b16 %v1579
        %v1715 = vunpack.c.l.b16 %v1580
        %v1716 = vunpack.c.l.b16 %v1581
        %v1717 = vunpack.c.l.b16 %v1582
        %v1718 = vunpack.c.l.b16 %v1583
        %v1719 = vunpack.c.l.b16 %v1584
        %v1720 = vunpack.c.l.b16 %v1585
        %v1721 = vunpack.c.l.b16 %v1586
        %v1722 = vunpack.c.l.b16 %v1587
        %v1723 = vunpack.c.l.b16 %v1588
        %v1724 = vunpack.c.l.b16 %v1589
        %v1725 = vunpack.c.l.b16 %v1590
        %v1726 = vunpack.c.l.b16 %v1591
        %v1727 = vunpack.c.l.b16 %v1592
        %v1728 = vunpack.c.l.b16 %v1593
        %v1729 = vunpack.c.l.b16 %v1594
        %v1730 = vunpack.c.l.b16 %v1595
        %v1731 = vunpack.c.l.b16 %v1596
        %v1732 = vunpack.c.l.b16 %v1597
        %v1733 = vunpack.c.l.b16 %v1598
        %v1734 = vunpack.c.l.b16 %v1599
        %v1735 = vunpack.c.l.b16 %v1600
        %v1736 = vunpack.c.l.b16 %v1601
        %v1737 = vunpack.c.l.b16 %v1602
        %v1738 = vunpack.c.l.b16 %v1603
        %v1739 = vunpack.c.l.b16 %v1604
        %v1740 = vunpack.c.l.b16 %v1605
        %v1741 = vunpack.c.l.b16 %v1606
        %v1742 = vpack.c.b16 %v1679, %v1678
        %v1743 = vpack.c.b16 %v1681, %v1680
        %v1744 = vpack.c.b16 %v1683, %v1682
        %v1745 = vpack.c.b16 %v1685, %v1684
        %v1746 = vpack.c.b16 %v1687, %v1686
        %v1747 = vpack.c.b16 %v1689, %v1688
        %v1748 = vpack.c.b16 %v1691, %v1690
        %v1749 = vpack.c.b16 %v1693, %v1692
        %v1750 = vpack.c.b16 %v1695, %v1694
        %v1751 = vpack.c.b16 %v1697, %v1696
        %v1752 = vpack.c.b16 %v1699, %v1698
        %v1753 = vpack.c.b16 %v1701, %v1700
        %v1754 = vpack.c.b16 %v1703, %v1702
        %v1755 = vpack.c.b16 %v1705, %v1704
        %v1756 = vpack.c.b16 %v1707, %v1706
        %v1757 = vpack.c.b16 %v1709, %v1708
        %v1758 = vpack.c.b16 %v1711, %v1710
        %v1759 = vpack.c.b16 %v1713, %v1712
        %v1760 = vpack.c.b16 %v1715, %v1714
        %v1761 = vpack.c.b16 %v1717, %v1716
        %v1762 = vpack.c.b16 %v1719, %v1718
        %v1763 = vpack.c.b16 %v1721, %v1720
        %v1764 = vpack.c.b16 %v1723, %v1722
        %v1765 = vpack.c.b16 %v1725, %v1724
        %v1766 = vpack.c.b16 %v1727, %v1726
        %v1767 = vpack.c.b16 %v1729, %v1728
        %v1768 = vpack.c.b16 %v1731, %v1730
        %v1769 = vpack.c.b16 %v1733, %v1732
        %v1770 = vpack.c.b16 %v1735, %v1734
        %v1771 = vpack.c.b16 %v1737, %v1736
        %v1772 = vpack.c.b16 %v1739, %v1738
        %v1773 = vpack.c.b16 %v1741, %v1740
        %1806 = vmatprep.subr.bf16.mxu0 0
        %1807 = vmatpush1.bf16.msra.mxu0 %v1749
        %1808 = vmatprep.subr.bf16.mxu0 0
        %1809 = vmatpush1.bf16.msra.mxu0 %v1748
        %1810 = vmatprep.subr.bf16.mxu0 0
        %1811 = vmatpush1.bf16.msra.mxu0 %v1747
        %1812 = vmatprep.subr.bf16.mxu0 0
        %1813 = vmatpush1.bf16.msra.mxu0 %v1746
        %1814 = vmatprep.subr.bf16.mxu0 0
        %1815 = vmatpush1.bf16.msra.mxu0 %v1745
        %1816 = vmatprep.subr.bf16.mxu0 0
        %1817 = vmatpush1.bf16.msra.mxu0 %v1744
        %1818 = vmatprep.subr.bf16.mxu0 0
        %1819 = vmatpush1.bf16.msra.mxu0 %v1743
        %1820 = vmatprep.subr.bf16.mxu0 0
        %1821 = vmatpush1.bf16.msra.mxu0 %v1742
        %1822 = vmatprep.subr.bf16.mxu0 0
        %1823 = vmatpush2.bf16.msra.mxu0 %v1757
        %1824 = vmatprep.subr.bf16.mxu0 0
        %1825 = vmatpush2.bf16.msra.mxu0 %v1756
        %1826 = vmatprep.subr.bf16.mxu0 0
        %1827 = vmatpush2.bf16.msra.mxu0 %v1755
        %1828 = vmatprep.subr.bf16.mxu0 0
        %1829 = vmatpush2.bf16.msra.mxu0 %v1754
        %1830 = vmatprep.subr.bf16.mxu0 0
        %1831 = vmatpush2.bf16.msra.mxu0 %v1753
        %1832 = vmatprep.subr.bf16.mxu0 0
        %1833 = vmatpush2.bf16.msra.mxu0 %v1752
        %1834 = vmatprep.subr.bf16.mxu0 0
        %1835 = vmatpush2.bf16.msra.mxu0 %v1751
        %1836 = vmatprep.subr.bf16.mxu0 0
        %1837 = vmatpush2.bf16.msra.mxu0 %v1750
        %1838 = vmatprep.mubr.bf16.mxu0 %v1540
        %1839 = vmatmul.mubr.bf16.gmra.mxu0 %v1539
        %v1840 = vpop.f32.mrf.mxu0
        %v1841 = vadd.f32 %v1612, %v1840
        %v1842 = vpop.f32.mrf.mxu0
        %v1843 = vpop.f32.mrf.mxu0
        %v1844 = vadd.f32 %v1612, %v1843
        %v1845 = vpop.f32.mrf.mxu0
        %1846 = vdwg.mxu0
        %1847 = vmatprep.subr.bf16.mxu0 0
        %1848 = vmatpush1.bf16.msra.mxu0 %v1765
        %1849 = vmatprep.subr.bf16.mxu0 0
        %1850 = vmatpush1.bf16.msra.mxu0 %v1764
        %1851 = vmatprep.subr.bf16.mxu0 0
        %1852 = vmatpush1.bf16.msra.mxu0 %v1763
        %1853 = vmatprep.subr.bf16.mxu0 0
        %1854 = vmatpush1.bf16.msra.mxu0 %v1762
        %1855 = vmatprep.subr.bf16.mxu0 0
        %1856 = vmatpush1.bf16.msra.mxu0 %v1761
        %1857 = vmatprep.subr.bf16.mxu0 0
        %1858 = vmatpush1.bf16.msra.mxu0 %v1760
        %1859 = vmatprep.subr.bf16.mxu0 0
        %1860 = vmatpush1.bf16.msra.mxu0 %v1759
        %1861 = vmatprep.subr.bf16.mxu0 0
        %1862 = vmatpush1.bf16.msra.mxu0 %v1758
        %1863 = vmatprep.subr.bf16.mxu0 0
        %1864 = vmatpush2.bf16.msra.mxu0 %v1773
        %1865 = vmatprep.subr.bf16.mxu0 0
        %1866 = vmatpush2.bf16.msra.mxu0 %v1772
        %1867 = vmatprep.subr.bf16.mxu0 0
        %1868 = vmatpush2.bf16.msra.mxu0 %v1771
        %1869 = vmatprep.subr.bf16.mxu0 0
        %1870 = vmatpush2.bf16.msra.mxu0 %v1770
        %1871 = vmatprep.subr.bf16.mxu0 0
        %1872 = vmatpush2.bf16.msra.mxu0 %v1769
        %1873 = vmatprep.subr.bf16.mxu0 0
        %1874 = vmatpush2.bf16.msra.mxu0 %v1768
        %1875 = vmatprep.subr.bf16.mxu0 0
        %1876 = vmatpush2.bf16.msra.mxu0 %v1767
        %1877 = vmatprep.subr.bf16.mxu0 0
        %1878 = vmatpush2.bf16.msra.mxu0 %v1766
        %1879 = vmatprep.mubr.bf16.mxu0 %v1542
        %1880 = vmatmul.mubr.bf16.gmra.mxu0 %v1541
        %v1881 = vpop.f32.mrf.mxu0
        %v1882 = vadd.f32 %v1841, %v1881
        %v1883 = vpop.f32.mrf.mxu0
        %v1884 = vpop.f32.mrf.mxu0
        %v1885 = vadd.f32 %v1844, %v1884
        %v1886 = vpop.f32.mrf.mxu0
        %1887 = vdwg.mxu0
        %v1888 = vmul.f32 %v1882, %v1882
        %v1889 = vmul.f32 %v1885, %v1885
        %v1890 = vmul.f32 %v1882, %v1888
        %v1891 = vmul.f32 %v1885, %v1889
        %v1892 = vmul.f32 %v1890, 0.044715
        %v1893 = vmul.f32 %v1891, 0.044715
        %v1894 = vadd.f32 %v1882, %v1892
        %v1895 = vadd.f32 %v1885, %v1893
        %v1896 = vmul.f32 %v1894, 0.7978846
        %v1897 = vmul.f32 %v1895, 0.7978846
        %v1898 = vtanh.pop %v1896
        %v1899 = vtanh.pop %v1897
        %v1900 = vadd.f32 %v1898, 1.0
        %v1901 = vadd.f32 %v1899, 1.0
        %v1902 = vmul.f32 %v1900, 0.5
        %v1903 = vmul.f32 %v1901, 0.5
        %v1904 = vmul.f32 %v1882, %v1902
        %v1905 = vmul.f32 %v1885, %v1903
        %v1907 = vrot.slane %v1904, 4
        %v1910 = vrot.slane %v1905, 4
        %v1912 = vpack.c.bf16 %v1904, %v1904
        %v1913 = vpack.c.bf16 %v1907, %v1907
        %v1914 = vpack.c.bf16 %v1905, %v1905
        %v1915 = vpack.c.bf16 %v1910, %v1910
        %v1916 = vld [vmem:[#allocation10] sm:$0xf]
        %v1917 = vld [vmem:[#allocation10 + $0x4] sm:$0xf]
        %v1918 = vld [vmem:[#allocation10 + $0x8] sm:$0xf]
        %v1919 = vld [vmem:[#allocation10 + $0xc] sm:$0xf]
        %v1920 = vld [vmem:[#allocation10 + $0x10] sm:$0xf]
        %v1921 = vld [vmem:[#allocation10 + $0x14] sm:$0xf]
        %v1922 = vld [vmem:[#allocation10 + $0x18] sm:$0xf]
        %v1923 = vld [vmem:[#allocation10 + $0x1c] sm:$0xf]
        %v1924 = vld [vmem:[#allocation10 + $0x20] sm:$0xf]
        %v1925 = vld [vmem:[#allocation10 + $0x24] sm:$0xf]
        %v1926 = vld [vmem:[#allocation10 + $0x28] sm:$0xf]
        %v1927 = vld [vmem:[#allocation10 + $0x2c] sm:$0xf]
        %v1928 = vld [vmem:[#allocation10 + $0x30] sm:$0xf]
        %v1929 = vld [vmem:[#allocation10 + $0x34] sm:$0xf]
        %v1930 = vld [vmem:[#allocation10 + $0x38] sm:$0xf]
        %v1931 = vld [vmem:[#allocation10 + $0x3c] sm:$0xf]
        %v1932 = vld [vmem:[#allocation10 + $0x40] sm:$0xf]
        %v1933 = vld [vmem:[#allocation10 + $0x44] sm:$0xf]
        %v1934 = vld [vmem:[#allocation10 + $0x48] sm:$0xf]
        %v1935 = vld [vmem:[#allocation10 + $0x4c] sm:$0xf]
        %v1936 = vld [vmem:[#allocation10 + $0x50] sm:$0xf]
        %v1937 = vld [vmem:[#allocation10 + $0x54] sm:$0xf]
        %v1938 = vld [vmem:[#allocation10 + $0x58] sm:$0xf]
        %v1939 = vld [vmem:[#allocation10 + $0x5c] sm:$0xf]
        %v1940 = vld [vmem:[#allocation10 + $0x60] sm:$0xf]
        %v1941 = vld [vmem:[#allocation10 + $0x64] sm:$0xf]
        %v1942 = vld [vmem:[#allocation10 + $0x68] sm:$0xf]
        %v1943 = vld [vmem:[#allocation10 + $0x6c] sm:$0xf]
        %v1944 = vld [vmem:[#allocation10 + $0x70] sm:$0xf]
        %v1945 = vld [vmem:[#allocation10 + $0x74] sm:$0xf]
        %v1946 = vld [vmem:[#allocation10 + $0x78] sm:$0xf]
        %v1947 = vld [vmem:[#allocation10 + $0x7c] sm:$0xf]
        %v1948 = vld [vmem:[#allocation10 + $0x80] sm:$0xf]
        %v1949 = vld [vmem:[#allocation10 + $0x84] sm:$0xf]
        %v1950 = vld [vmem:[#allocation10 + $0x88] sm:$0xf]
        %v1951 = vld [vmem:[#allocation10 + $0x8c] sm:$0xf]
        %v1952 = vld [vmem:[#allocation10 + $0x90] sm:$0xf]
        %v1953 = vld [vmem:[#allocation10 + $0x94] sm:$0xf]
        %v1954 = vld [vmem:[#allocation10 + $0x98] sm:$0xf]
        %v1955 = vld [vmem:[#allocation10 + $0x9c] sm:$0xf]
        %v1956 = vld [vmem:[#allocation10 + $0xa0] sm:$0xf]
        %v1957 = vld [vmem:[#allocation10 + $0xa4] sm:$0xf]
        %v1958 = vld [vmem:[#allocation10 + $0xa8] sm:$0xf]
        %v1959 = vld [vmem:[#allocation10 + $0xac] sm:$0xf]
        %v1960 = vld [vmem:[#allocation10 + $0xb0] sm:$0xf]
        %v1961 = vld [vmem:[#allocation10 + $0xb4] sm:$0xf]
        %v1962 = vld [vmem:[#allocation10 + $0xb8] sm:$0xf]
        %v1963 = vld [vmem:[#allocation10 + $0xbc] sm:$0xf]
        %v1964 = vld [vmem:[#allocation10 + $0xc0] sm:$0xf]
        %v1965 = vld [vmem:[#allocation10 + $0xc4] sm:$0xf]
        %v1966 = vld [vmem:[#allocation10 + $0xc8] sm:$0xf]
        %v1967 = vld [vmem:[#allocation10 + $0xcc] sm:$0xf]
        %v1968 = vld [vmem:[#allocation10 + $0xd0] sm:$0xf]
        %v1969 = vld [vmem:[#allocation10 + $0xd4] sm:$0xf]
        %v1970 = vld [vmem:[#allocation10 + $0xd8] sm:$0xf]
        %v1971 = vld [vmem:[#allocation10 + $0xdc] sm:$0xf]
        %v1972 = vld [vmem:[#allocation10 + $0xe0] sm:$0xf]
        %v1973 = vld [vmem:[#allocation10 + $0xe4] sm:$0xf]
        %v1974 = vld [vmem:[#allocation10 + $0xe8] sm:$0xf]
        %v1975 = vld [vmem:[#allocation10 + $0xec] sm:$0xf]
        %v1976 = vld [vmem:[#allocation10 + $0xf0] sm:$0xf]
        %v1977 = vld [vmem:[#allocation10 + $0xf4] sm:$0xf]
        %v1978 = vld [vmem:[#allocation10 + $0xf8] sm:$0xf]
        %v1979 = vld [vmem:[#allocation10 + $0xfc] sm:$0xf]
        %v1980 = vld [vmem:[%s8] sm:$0x1]
        %v1982 = vlaneseq
        %v1983 = vshrl.u32 %v1982, 7
        %v1984 = vsub.s32 0, %v1983
        %v1985 = vrot.slane %v1980, %v1984
        %v2051 = vunpack.c.l.b16 %v1916
        %v2052 = vunpack.c.l.b16 %v1917
        %v2053 = vunpack.c.l.b16 %v1918
        %v2054 = vunpack.c.l.b16 %v1919
        %v2055 = vunpack.c.l.b16 %v1920
        %v2056 = vunpack.c.l.b16 %v1921
        %v2057 = vunpack.c.l.b16 %v1922
        %v2058 = vunpack.c.l.b16 %v1923
        %v2059 = vunpack.c.l.b16 %v1924
        %v2060 = vunpack.c.l.b16 %v1925
        %v2061 = vunpack.c.l.b16 %v1926
        %v2062 = vunpack.c.l.b16 %v1927
        %v2063 = vunpack.c.l.b16 %v1928
        %v2064 = vunpack.c.l.b16 %v1929
        %v2065 = vunpack.c.l.b16 %v1930
        %v2066 = vunpack.c.l.b16 %v1931
        %v2067 = vunpack.c.l.b16 %v1932
        %v2068 = vunpack.c.l.b16 %v1933
        %v2069 = vunpack.c.l.b16 %v1934
        %v2070 = vunpack.c.l.b16 %v1935
        %v2071 = vunpack.c.l.b16 %v1936
        %v2072 = vunpack.c.l.b16 %v1937
        %v2073 = vunpack.c.l.b16 %v1938
        %v2074 = vunpack.c.l.b16 %v1939
        %v2075 = vunpack.c.l.b16 %v1940
        %v2076 = vunpack.c.l.b16 %v1941
        %v2077 = vunpack.c.l.b16 %v1942
        %v2078 = vunpack.c.l.b16 %v1943
        %v2079 = vunpack.c.l.b16 %v1944
        %v2080 = vunpack.c.l.b16 %v1945
        %v2081 = vunpack.c.l.b16 %v1946
        %v2082 = vunpack.c.l.b16 %v1947
        %v2083 = vunpack.c.l.b16 %v1948
        %v2084 = vunpack.c.l.b16 %v1949
        %v2085 = vunpack.c.l.b16 %v1950
        %v2086 = vunpack.c.l.b16 %v1951
        %v2087 = vunpack.c.l.b16 %v1952
        %v2088 = vunpack.c.l.b16 %v1953
        %v2089 = vunpack.c.l.b16 %v1954
        %v2090 = vunpack.c.l.b16 %v1955
        %v2091 = vunpack.c.l.b16 %v1956
        %v2092 = vunpack.c.l.b16 %v1957
        %v2093 = vunpack.c.l.b16 %v1958
        %v2094 = vunpack.c.l.b16 %v1959
        %v2095 = vunpack.c.l.b16 %v1960
        %v2096 = vunpack.c.l.b16 %v1961
        %v2097 = vunpack.c.l.b16 %v1962
        %v2098 = vunpack.c.l.b16 %v1963
        %v2099 = vunpack.c.l.b16 %v1964
        %v2100 = vunpack.c.l.b16 %v1965
        %v2101 = vunpack.c.l.b16 %v1966
        %v2102 = vunpack.c.l.b16 %v1967
        %v2103 = vunpack.c.l.b16 %v1968
        %v2104 = vunpack.c.l.b16 %v1969
        %v2105 = vunpack.c.l.b16 %v1970
        %v2106 = vunpack.c.l.b16 %v1971
        %v2107 = vunpack.c.l.b16 %v1972
        %v2108 = vunpack.c.l.b16 %v1973
        %v2109 = vunpack.c.l.b16 %v1974
        %v2110 = vunpack.c.l.b16 %v1975
        %v2111 = vunpack.c.l.b16 %v1976
        %v2112 = vunpack.c.l.b16 %v1977
        %v2113 = vunpack.c.l.b16 %v1978
        %v2114 = vunpack.c.l.b16 %v1979
        %v2115 = vpack.c.b16 %v2052, %v2051
        %v2116 = vpack.c.b16 %v2054, %v2053
        %v2117 = vpack.c.b16 %v2056, %v2055
        %v2118 = vpack.c.b16 %v2058, %v2057
        %v2119 = vpack.c.b16 %v2060, %v2059
        %v2120 = vpack.c.b16 %v2062, %v2061
        %v2121 = vpack.c.b16 %v2064, %v2063
        %v2122 = vpack.c.b16 %v2066, %v2065
        %v2123 = vpack.c.b16 %v2068, %v2067
        %v2124 = vpack.c.b16 %v2070, %v2069
        %v2125 = vpack.c.b16 %v2072, %v2071
        %v2126 = vpack.c.b16 %v2074, %v2073
        %v2127 = vpack.c.b16 %v2076, %v2075
        %v2128 = vpack.c.b16 %v2078, %v2077
        %v2129 = vpack.c.b16 %v2080, %v2079
        %v2130 = vpack.c.b16 %v2082, %v2081
        %v2131 = vpack.c.b16 %v2084, %v2083
        %v2132 = vpack.c.b16 %v2086, %v2085
        %v2133 = vpack.c.b16 %v2088, %v2087
        %v2134 = vpack.c.b16 %v2090, %v2089
        %v2135 = vpack.c.b16 %v2092, %v2091
        %v2136 = vpack.c.b16 %v2094, %v2093
        %v2137 = vpack.c.b16 %v2096, %v2095
        %v2138 = vpack.c.b16 %v2098, %v2097
        %v2139 = vpack.c.b16 %v2100, %v2099
        %v2140 = vpack.c.b16 %v2102, %v2101
        %v2141 = vpack.c.b16 %v2104, %v2103
        %v2142 = vpack.c.b16 %v2106, %v2105
        %v2143 = vpack.c.b16 %v2108, %v2107
        %v2144 = vpack.c.b16 %v2110, %v2109
        %v2145 = vpack.c.b16 %v2112, %v2111
        %v2146 = vpack.c.b16 %v2114, %v2113
        %2179 = vmatprep.subr.bf16.mxu0 0
        %2180 = vmatpush1.bf16.msra.mxu0 %v2122
        %2181 = vmatprep.subr.bf16.mxu0 0
        %2182 = vmatpush1.bf16.msra.mxu0 %v2121
        %2183 = vmatprep.subr.bf16.mxu0 0
        %2184 = vmatpush1.bf16.msra.mxu0 %v2120
        %2185 = vmatprep.subr.bf16.mxu0 0
        %2186 = vmatpush1.bf16.msra.mxu0 %v2119
        %2187 = vmatprep.subr.bf16.mxu0 0
        %2188 = vmatpush1.bf16.msra.mxu0 %v2118
        %2189 = vmatprep.subr.bf16.mxu0 0
        %2190 = vmatpush1.bf16.msra.mxu0 %v2117
        %2191 = vmatprep.subr.bf16.mxu0 0
        %2192 = vmatpush1.bf16.msra.mxu0 %v2116
        %2193 = vmatprep.subr.bf16.mxu0 0
        %2194 = vmatpush1.bf16.msra.mxu0 %v2115
        %2195 = vmatprep.subr.bf16.mxu0 0
        %2196 = vmatpush2.bf16.msra.mxu0 %v2130
        %2197 = vmatprep.subr.bf16.mxu0 0
        %2198 = vmatpush2.bf16.msra.mxu0 %v2129
        %2199 = vmatprep.subr.bf16.mxu0 0
        %2200 = vmatpush2.bf16.msra.mxu0 %v2128
        %2201 = vmatprep.subr.bf16.mxu0 0
        %2202 = vmatpush2.bf16.msra.mxu0 %v2127
        %2203 = vmatprep.subr.bf16.mxu0 0
        %2204 = vmatpush2.bf16.msra.mxu0 %v2126
        %2205 = vmatprep.subr.bf16.mxu0 0
        %2206 = vmatpush2.bf16.msra.mxu0 %v2125
        %2207 = vmatprep.subr.bf16.mxu0 0
        %2208 = vmatpush2.bf16.msra.mxu0 %v2124
        %2209 = vmatprep.subr.bf16.mxu0 0
        %2210 = vmatpush2.bf16.msra.mxu0 %v2123
        %2211 = vmatprep.mubr.bf16.mxu0 %v1913
        %2212 = vmatmul.mubr.bf16.gmra.mxu0 %v1912
        %v2213 = vpop.f32.mrf.mxu0
        %v2214 = vadd.f32 %v1985, %v2213
        %v2215 = vpop.f32.mrf.mxu0
        %v2216 = vpop.f32.mrf.mxu0
        %v2217 = vpop.f32.mrf.mxu0
        %2218 = vdwg.mxu0
        %2219 = vmatprep.subr.bf16.mxu0 0
        %2220 = vmatpush1.bf16.msra.mxu0 %v2138
        %2221 = vmatprep.subr.bf16.mxu0 0
        %2222 = vmatpush1.bf16.msra.mxu0 %v2137
        %2223 = vmatprep.subr.bf16.mxu0 0
        %2224 = vmatpush1.bf16.msra.mxu0 %v2136
        %2225 = vmatprep.subr.bf16.mxu0 0
        %2226 = vmatpush1.bf16.msra.mxu0 %v2135
        %2227 = vmatprep.subr.bf16.mxu0 0
        %2228 = vmatpush1.bf16.msra.mxu0 %v2134
        %2229 = vmatprep.subr.bf16.mxu0 0
        %2230 = vmatpush1.bf16.msra.mxu0 %v2133
        %2231 = vmatprep.subr.bf16.mxu0 0
        %2232 = vmatpush1.bf16.msra.mxu0 %v2132
        %2233 = vmatprep.subr.bf16.mxu0 0
        %2234 = vmatpush1.bf16.msra.mxu0 %v2131
        %2235 = vmatprep.subr.bf16.mxu0 0
        %2236 = vmatpush2.bf16.msra.mxu0 %v2146
        %2237 = vmatprep.subr.bf16.mxu0 0
        %2238 = vmatpush2.bf16.msra.mxu0 %v2145
        %2239 = vmatprep.subr.bf16.mxu0 0
        %2240 = vmatpush2.bf16.msra.mxu0 %v2144
        %2241 = vmatprep.subr.bf16.mxu0 0
        %2242 = vmatpush2.bf16.msra.mxu0 %v2143
        %2243 = vmatprep.subr.bf16.mxu0 0
        %2244 = vmatpush2.bf16.msra.mxu0 %v2142
        %2245 = vmatprep.subr.bf16.mxu0 0
        %2246 = vmatpush2.bf16.msra.mxu0 %v2141
        %2247 = vmatprep.subr.bf16.mxu0 0
        %2248 = vmatpush2.bf16.msra.mxu0 %v2140
        %2249 = vmatprep.subr.bf16.mxu0 0
        %2250 = vmatpush2.bf16.msra.mxu0 %v2139
        %2251 = vmatprep.mubr.bf16.mxu0 %v1915
        %2252 = vmatmul.mubr.bf16.gmra.mxu0 %v1914
        %v2253 = vpop.f32.mrf.mxu0
        %v2254 = vadd.f32 %v2214, %v2253
        %v2255 = vpop.f32.mrf.mxu0
        %v2256 = vpop.f32.mrf.mxu0
        %v2257 = vpop.f32.mrf.mxu0
        %2258 = vdwg.mxu0
        %v2259 = vmul.f32 %v2254, %v2254
        %v2260 = vmul.f32 %v2254, %v2259
        %v2261 = vmul.f32 %v2260, 0.044715
        %v2262 = vadd.f32 %v2254, %v2261
        %v2263 = vmul.f32 %v2262, 0.7978846
        %v2264 = vtanh.pop %v2263
        %v2265 = vadd.f32 %v2264, 1.0
        %v2266 = vmul.f32 %v2265, 0.5
        %v2267 = vmul.f32 %v2254, %v2266
        %vm2268 = vcmask 1043456
        %v2269 = vsel %vm2268, %v2267, 0.0
        %v2270 = vrot.slane %v2269, 4
        %v2271 = vadd.f32 %v2269, %v2270
        %v2272 = vrot.slane %v2271, 2
        %v2273 = vadd.f32 %v2271, %v2272
        %v2274 = vrot.slane %v2273, 1
        %v2275 = vadd.f32 %v2273, %v2274
        %v2276 = vrcp.pop 4.0
        %v2277 = vmul.f32 %v2275, %v2276
        %2278 = vst [vmem:[%s407] sm:$0x1] %v2277
        %s2279 = sand.u32 %s230, 1
        %s2280 = scalar_lea.sflag [#allocation4], %s2279
        %s2281 = sand.u32 %s230, 1
        %s2282 = scalar_lea.vmem [#allocation11], %s2281
        // Predicated region
        $region77: #{tpu_custom_call.1} parent=55 // pred_check
          %p2283 = pneg %p240
        $region78: #{tpu_custom_call.1} parent=55 // pred_check_branch
          %2285 = sbr.rel (%p2283) target = $region80
        $region79: #{tpu_custom_call.1} parent=55 // pred_region
          %s2287 = ssub.s32 16, 16
          %2288 = vsyncadd %s2280, %s2287
          %s2289 = smul.addr %s28, 16
          %s2290 = scalar_lea.hbm %s9, %s2289
          %s2292 = sshll.u32 %s2282, 4
          %s2293 = int_to_ptr.vmem [resolvable:$true] %s2292
          %2295 = dma.vmem_to_hbm [thread:$0]  %s2293, 16, %s2290, %s2280
        $region80: #{tpu_custom_call.1} parent=55 // pred_fallthru
          _
      $region56: #{tpu_custom_call.1} parent=5 // pred_fallthru
        _
      %p2296 = scmp.le.s32.totalorder 2, %s23
      // Predicated region
      $region81: #{tpu_custom_call.1} parent=5 // pred_check
        %p2297 = pneg %p2296
      $region82: #{tpu_custom_call.1} parent=5 // pred_check_branch
        %2299 = sbr.rel (%p2297) target = $region84
      $region83: #{tpu_custom_call.1} parent=5 // pred_region
        %s2300 = ssub.s32 %s23, 2
        // Predicated region
        $region85: #{tpu_custom_call.1} parent=83 // pred_check
          %p2301 = pneg %p246
        $region86: #{tpu_custom_call.1} parent=83 // pred_check_branch
          %2303 = sbr.rel (%p2301) target = $region88
        $region87: #{tpu_custom_call.1} parent=83 // pred_region
          %s2304 = sand.u32 %s231, 1
          %s2305 = scalar_lea.sflag [#allocation4], %s2304
          %s2306 = sand.u32 %s231, 1
          %s2307 = scalar_lea.vmem [#allocation11], %s2306
          %2308 = dma.done %s2305, 16
        $region88: #{tpu_custom_call.1} parent=83 // pred_fallthru
          _
      $region84: #{tpu_custom_call.1} parent=5 // pred_fallthru
        _
    $region6: #{tpu_custom_call.1} parent=1 // loop_footer
      %s27 = sadd.s32 1, %s23
    $region7: #{tpu_custom_call.1} parent=1 // loop_footer_branch
      %22 = sbr.rel target = $region3
    $region8: #{tpu_custom_call.1} parent=1 // loop_exit
      _
    %2309 = vsyncpa [#allocation3], 1
    %s2310 = scalar_lea.sflag [#allocation3], 1
    %2311 = vsyncpa %s2310, 1
    %2312 = vsyncpa [#allocation6], 1
    %2313 = vsyncpa [#allocation9], 1
    %2314 = vsyncpa [#allocation4], 1
    %s2315 = scalar_lea.sflag [#allocation4], 1
    %2316 = vsyncpa %s2315, 1

</llo_original>
